<compile_context>
chip_gen: v7x
topology: tpu7x:2x2x1
jax: 0.10.0
libtpu: 0.0.40
codegen_flags: <defaults>
</compile_context>

<pallas_src>
import functools

import jax
import jax.numpy as jnp
import numpy as np
from jax.experimental import pallas as pl
from jax.experimental.pallas import tpu as pltpu


def _conv_attn_kernel(x_ref, wq_ref, wk_ref, wv_ref, bq_ref, bk_ref, bv_ref,
                      o_ref, *, inv_sqrt_kc):
    """One batch element of ConvolutionalAttention.

    x_ref : (1, IC, H, W)   VMEM
    w*_ref: (C*IC,)         SMEM   1x1-conv weight, row-major (c, i) flattened
    b*_ref: (C,)            SMEM
    o_ref : (1, W, C*H)     VMEM   transposed, lane-dense output slab
    """
    _, IC, H, W = x_ref.shape
    CH = o_ref.shape[2]
    C = CH // H

    # Load the IC input planes once; reused by all three projections.
    x_planes = [x_ref[0, i] for i in range(IC)]             # IC x (H, W) f32

    def project(w_ref, b_ref, c, scale=None):
        # 1x1 conv for output channel c: scalar-broadcast MAC over the input
        # planes (VPU).  `scale` folds 1/sqrt(KC) into the SMEM scalars.
        def sc(val):
            return val * scale if scale is not None else val
        acc = x_planes[0] * sc(w_ref[c * IC + 0])
        for i in range(1, IC):
            acc = acc + x_planes[i] * sc(w_ref[c * IC + i])
        return acc + sc(b_ref[c])

    # Stack all channels along rows: (C*H, W).
    q = jnp.concatenate([project(wq_ref, bq_ref, c, inv_sqrt_kc)
                         for c in range(C)], axis=0)
    k = jnp.concatenate([project(wk_ref, bk_ref, c) for c in range(C)], axis=0)
    v = jnp.concatenate([project(wv_ref, bv_ref, c) for c in range(C)], axis=0)

    # One stacked score matmul on the MXU: (C*H, C*H), full-f32 passes.
    scores = jax.lax.dot_general(
        q, k, (((1,), (1,)), ((), ())),
        precision=jax.lax.Precision.HIGHEST,
        preferred_element_type=jnp.float32)

    # Block-diagonal additive mask: entries coupling different channels get
    # -1e30 and softmax to exactly 0, recovering the per-channel attention.
    rows = jax.lax.broadcasted_iota(jnp.int32, (CH, CH), 0)
    cols = jax.lax.broadcasted_iota(jnp.int32, (CH, CH), 1)
    if H & (H - 1) == 0:                         # power-of-two H: cheap shifts
        shift = H.bit_length() - 1
        same_block = (rows >> shift) == (cols >> shift)
    else:
        same_block = (rows // H) == (cols // H)
    scores = jnp.where(same_block, scores, jnp.float32(-1e30))

    # Numerically stable softmax over the last axis (single 64-lane pass).
    m = jnp.max(scores, axis=-1, keepdims=True)
    e = jnp.exp(scores - m)
    l = jnp.sum(e, axis=-1, keepdims=True)
    p = e * pl.reciprocal(l, approx=False)       # exact: keeps 1e-4 tolerance

    # out^T = v^T @ p^T computed directly on the MXU so the kernel emits the
    # lane-dense (W, C*H) slab in one store (instead of C masked plane stores).
    v_t = jnp.transpose(v)                       # (W, C*H)
    out_t = jax.lax.dot_general(
        v_t, p, (((1,), (1,)), ((), ())),
        precision=jax.lax.Precision.HIGHEST,
        preferred_element_type=jnp.float32)
    o_ref[0] = out_t.astype(o_ref.dtype)


def conv_attention(x, wq, bq, wk, bk, wv, bv):
    """x: (N, IC, H, W) f32. wq/wk: (KC, IC), wv: (VC, IC), biases: (KC,)/(VC,)."""
    N, IC, H, W = x.shape
    KC = wq.shape[0]
    VC = wv.shape[0]
    # The PyTorch module implicitly requires KC == VC (batched @ broadcast).
    assert KC == VC, "key_channels must equal val_channels for this module"
    C = KC
    CH = C * H

    kernel = functools.partial(_conv_attn_kernel,
                               inv_sqrt_kc=float(1.0 / np.sqrt(KC)))
    smem = pl.BlockSpec(memory_space=pltpu.MemorySpace.SMEM)

    out_t = pl.pallas_call(
        kernel,
        out_shape=jax.ShapeDtypeStruct((N, W, CH), x.dtype),
        grid_spec=pltpu.PrefetchScalarGridSpec(
            num_scalar_prefetch=0,
            grid=(N,),
            in_specs=[
                pl.BlockSpec((1, IC, H, W), lambda n: (n, 0, 0, 0)),  # x
                smem, smem, smem,                                     # wq, wk, wv
                smem, smem, smem,                                     # bq, bk, bv
            ],
            out_specs=pl.BlockSpec((1, W, CH), lambda n: (n, 0, 0)),
        ),
        compiler_params=pltpu.CompilerParams(
            dimension_semantics=("parallel",)),
    )(x, wq.reshape(-1), wk.reshape(-1), wv.reshape(-1), bq, bk, bv)

    # (N, W, C*H) -> (N, C, H, W): tiny layout plumbing on an 8 KiB output.
    return out_t.reshape(N, W, C, H).transpose(0, 2, 3, 1)


def _reference(x, wq, bq, wk, bk, wv, bv):
    """Pure-JAX reference mirroring the PyTorch forward."""
    kc = wq.shape[0]
    hp = jax.lax.Precision.HIGHEST
    q = jnp.einsum("ki,nihw->nkhw", wq, x, precision=hp) + bq[None, :, None, None]
    k = jnp.einsum("ki,nihw->nkhw", wk, x, precision=hp) + bk[None, :, None, None]
    v = jnp.einsum("ki,nihw->nkhw", wv, x, precision=hp) + bv[None, :, None, None]
    s = jnp.einsum("nchw,ncgw->nchg", q, k, precision=hp) / np.sqrt(kc)
    p = jax.nn.softmax(s, axis=-1)
    return jnp.einsum("nchg,ncgw->nchw", p, v, precision=hp)


if __name__ == "__main__":
    # Module hyperparams: in_channels=4, key_channels=4, val_channels=4
    # (the `spectral` flag is accepted by __init__ but never used in forward).
    N, IC, KC, VC, H, W = 2, 4, 4, 4, 16, 16

    key = jax.random.PRNGKey(0)
    kx, k1, k2, k3, k4, k5, k6 = jax.random.split(key, 7)

    x = jax.random.normal(kx, (N, IC, H, W), dtype=jnp.float32)

    # Deterministic Conv2d(IC, C, 1) parameter init (kaiming-uniform-like bound).
    bound = 1.0 / np.sqrt(IC)  # fan_in = IC * 1 * 1
    wq = jax.random.uniform(k1, (KC, IC), jnp.float32, -bound, bound)
    wk = jax.random.uniform(k2, (KC, IC), jnp.float32, -bound, bound)
    wv = jax.random.uniform(k3, (VC, IC), jnp.float32, -bound, bound)
    bq = jax.random.uniform(k4, (KC,), jnp.float32, -bound, bound)
    bk = jax.random.uniform(k5, (KC,), jnp.float32, -bound, bound)
    bv = jax.random.uniform(k6, (VC,), jnp.float32, -bound, bound)

    y = jax.block_until_ready(conv_attention(x, wq, bq, wk, bk, wv, bv))
    assert y.shape == (N, KC, H, W), y.shape

    y_ref = jax.block_until_ready(_reference(x, wq, bq, wk, bk, wv, bv))
    np.testing.assert_allclose(np.asarray(y), np.asarray(y_ref),
                               rtol=1e-4, atol=1e-4)

    print("KERNEL_OK")
</pallas_src>

<mosaic_0001>
module attributes {stable_mosaic.version = 11 : i64} {
  func.func @_conv_attn_kernel(%arg0: i32, %arg1: memref<1x4x16x16xf32, #tpu.memory_space<vmem>>, %arg2: memref<16xf32, #tpu.memory_space<smem>>, %arg3: memref<16xf32, #tpu.memory_space<smem>>, %arg4: memref<16xf32, #tpu.memory_space<smem>>, %arg5: memref<4xf32, #tpu.memory_space<smem>>, %arg6: memref<4xf32, #tpu.memory_space<smem>>, %arg7: memref<4xf32, #tpu.memory_space<smem>>, %arg8: memref<1x16x64xf32, #tpu.memory_space<vmem>>) attributes {dimension_semantics = [#tpu.dimension_semantics<parallel>], iteration_bounds = array<i64: 2>, scalar_prefetch = 0 : i64, scratch_operands = 0 : i64, tpu.core_type = #tpu.core_type<tc>, window_params = [{transform_indices = @transform_0, window_bounds = array<i64: 1, 4, 16, 16>}, {transform_indices = @transform_1, window_bounds = array<i64: 16>}, {transform_indices = @transform_2, window_bounds = array<i64: 16>}, {transform_indices = @transform_3, window_bounds = array<i64: 16>}, {transform_indices = @transform_4, window_bounds = array<i64: 4>}, {transform_indices = @transform_5, window_bounds = array<i64: 4>}, {transform_indices = @transform_6, window_bounds = array<i64: 4>}, {transform_indices = @transform_7, window_bounds = array<i64: 1, 16, 64>}]} {
    %c0 = arith.constant 0 : index
    %c0_0 = arith.constant 0 : index
    %c0_1 = arith.constant 0 : index
    %c0_2 = arith.constant 0 : index
    %0 = vector.load %arg1[%c0, %c0_0, %c0_1, %c0_2] : memref<1x4x16x16xf32, #tpu.memory_space<vmem>>, vector<1x1x16x16xf32>
    %1 = vector.shape_cast %0 : vector<1x1x16x16xf32> to vector<16x16xf32>
    %c0_3 = arith.constant 0 : index
    %c1 = arith.constant 1 : index
    %c0_4 = arith.constant 0 : index
    %c0_5 = arith.constant 0 : index
    %2 = vector.load %arg1[%c0_3, %c1, %c0_4, %c0_5] : memref<1x4x16x16xf32, #tpu.memory_space<vmem>>, vector<1x1x16x16xf32>
    %3 = vector.shape_cast %2 : vector<1x1x16x16xf32> to vector<16x16xf32>
    %c0_6 = arith.constant 0 : index
    %c2 = arith.constant 2 : index
    %c0_7 = arith.constant 0 : index
    %c0_8 = arith.constant 0 : index
    %4 = vector.load %arg1[%c0_6, %c2, %c0_7, %c0_8] : memref<1x4x16x16xf32, #tpu.memory_space<vmem>>, vector<1x1x16x16xf32>
    %5 = vector.shape_cast %4 : vector<1x1x16x16xf32> to vector<16x16xf32>
    %c0_9 = arith.constant 0 : index
    %c3 = arith.constant 3 : index
    %c0_10 = arith.constant 0 : index
    %c0_11 = arith.constant 0 : index
    %6 = vector.load %arg1[%c0_9, %c3, %c0_10, %c0_11] : memref<1x4x16x16xf32, #tpu.memory_space<vmem>>, vector<1x1x16x16xf32>
    %7 = vector.shape_cast %6 : vector<1x1x16x16xf32> to vector<16x16xf32>
    %c0_12 = arith.constant 0 : index
    %8 = memref.load %arg2[%c0_12] : memref<16xf32, #tpu.memory_space<smem>>
    %cst = arith.constant 5.000000e-01 : f32
    %9 = arith.mulf %8, %cst : f32
    %10 = vector.broadcast %9 : f32 to vector<16x16xf32>
    %11 = arith.mulf %1, %10 : vector<16x16xf32>
    %c1_13 = arith.constant 1 : index
    %12 = memref.load %arg2[%c1_13] : memref<16xf32, #tpu.memory_space<smem>>
    %cst_14 = arith.constant 5.000000e-01 : f32
    %13 = arith.mulf %12, %cst_14 : f32
    %14 = vector.broadcast %13 : f32 to vector<16x16xf32>
    %15 = arith.mulf %3, %14 : vector<16x16xf32>
    %16 = arith.addf %11, %15 : vector<16x16xf32>
    %c2_15 = arith.constant 2 : index
    %17 = memref.load %arg2[%c2_15] : memref<16xf32, #tpu.memory_space<smem>>
    %cst_16 = arith.constant 5.000000e-01 : f32
    %18 = arith.mulf %17, %cst_16 : f32
    %19 = vector.broadcast %18 : f32 to vector<16x16xf32>
    %20 = arith.mulf %5, %19 : vector<16x16xf32>
    %21 = arith.addf %16, %20 : vector<16x16xf32>
    %c3_17 = arith.constant 3 : index
    %22 = memref.load %arg2[%c3_17] : memref<16xf32, #tpu.memory_space<smem>>
    %cst_18 = arith.constant 5.000000e-01 : f32
    %23 = arith.mulf %22, %cst_18 : f32
    %24 = vector.broadcast %23 : f32 to vector<16x16xf32>
    %25 = arith.mulf %7, %24 : vector<16x16xf32>
    %26 = arith.addf %21, %25 : vector<16x16xf32>
    %c0_19 = arith.constant 0 : index
    %27 = memref.load %arg5[%c0_19] : memref<4xf32, #tpu.memory_space<smem>>
    %cst_20 = arith.constant 5.000000e-01 : f32
    %28 = arith.mulf %27, %cst_20 : f32
    %29 = vector.broadcast %28 : f32 to vector<16x16xf32>
    %30 = arith.addf %26, %29 : vector<16x16xf32>
    %c4 = arith.constant 4 : index
    %31 = memref.load %arg2[%c4] : memref<16xf32, #tpu.memory_space<smem>>
    %cst_21 = arith.constant 5.000000e-01 : f32
    %32 = arith.mulf %31, %cst_21 : f32
    %33 = vector.broadcast %32 : f32 to vector<16x16xf32>
    %34 = arith.mulf %1, %33 : vector<16x16xf32>
    %c5 = arith.constant 5 : index
    %35 = memref.load %arg2[%c5] : memref<16xf32, #tpu.memory_space<smem>>
    %cst_22 = arith.constant 5.000000e-01 : f32
    %36 = arith.mulf %35, %cst_22 : f32
    %37 = vector.broadcast %36 : f32 to vector<16x16xf32>
    %38 = arith.mulf %3, %37 : vector<16x16xf32>
    %39 = arith.addf %34, %38 : vector<16x16xf32>
    %c6 = arith.constant 6 : index
    %40 = memref.load %arg2[%c6] : memref<16xf32, #tpu.memory_space<smem>>
    %cst_23 = arith.constant 5.000000e-01 : f32
    %41 = arith.mulf %40, %cst_23 : f32
    %42 = vector.broadcast %41 : f32 to vector<16x16xf32>
    %43 = arith.mulf %5, %42 : vector<16x16xf32>
    %44 = arith.addf %39, %43 : vector<16x16xf32>
    %c7 = arith.constant 7 : index
    %45 = memref.load %arg2[%c7] : memref<16xf32, #tpu.memory_space<smem>>
    %cst_24 = arith.constant 5.000000e-01 : f32
    %46 = arith.mulf %45, %cst_24 : f32
    %47 = vector.broadcast %46 : f32 to vector<16x16xf32>
    %48 = arith.mulf %7, %47 : vector<16x16xf32>
    %49 = arith.addf %44, %48 : vector<16x16xf32>
    %c1_25 = arith.constant 1 : index
    %50 = memref.load %arg5[%c1_25] : memref<4xf32, #tpu.memory_space<smem>>
    %cst_26 = arith.constant 5.000000e-01 : f32
    %51 = arith.mulf %50, %cst_26 : f32
    %52 = vector.broadcast %51 : f32 to vector<16x16xf32>
    %53 = arith.addf %49, %52 : vector<16x16xf32>
    %c8 = arith.constant 8 : index
    %54 = memref.load %arg2[%c8] : memref<16xf32, #tpu.memory_space<smem>>
    %cst_27 = arith.constant 5.000000e-01 : f32
    %55 = arith.mulf %54, %cst_27 : f32
    %56 = vector.broadcast %55 : f32 to vector<16x16xf32>
    %57 = arith.mulf %1, %56 : vector<16x16xf32>
    %c9 = arith.constant 9 : index
    %58 = memref.load %arg2[%c9] : memref<16xf32, #tpu.memory_space<smem>>
    %cst_28 = arith.constant 5.000000e-01 : f32
    %59 = arith.mulf %58, %cst_28 : f32
    %60 = vector.broadcast %59 : f32 to vector<16x16xf32>
    %61 = arith.mulf %3, %60 : vector<16x16xf32>
    %62 = arith.addf %57, %61 : vector<16x16xf32>
    %c10 = arith.constant 10 : index
    %63 = memref.load %arg2[%c10] : memref<16xf32, #tpu.memory_space<smem>>
    %cst_29 = arith.constant 5.000000e-01 : f32
    %64 = arith.mulf %63, %cst_29 : f32
    %65 = vector.broadcast %64 : f32 to vector<16x16xf32>
    %66 = arith.mulf %5, %65 : vector<16x16xf32>
    %67 = arith.addf %62, %66 : vector<16x16xf32>
    %c11 = arith.constant 11 : index
    %68 = memref.load %arg2[%c11] : memref<16xf32, #tpu.memory_space<smem>>
    %cst_30 = arith.constant 5.000000e-01 : f32
    %69 = arith.mulf %68, %cst_30 : f32
    %70 = vector.broadcast %69 : f32 to vector<16x16xf32>
    %71 = arith.mulf %7, %70 : vector<16x16xf32>
    %72 = arith.addf %67, %71 : vector<16x16xf32>
    %c2_31 = arith.constant 2 : index
    %73 = memref.load %arg5[%c2_31] : memref<4xf32, #tpu.memory_space<smem>>
    %cst_32 = arith.constant 5.000000e-01 : f32
    %74 = arith.mulf %73, %cst_32 : f32
    %75 = vector.broadcast %74 : f32 to vector<16x16xf32>
    %76 = arith.addf %72, %75 : vector<16x16xf32>
    %c12 = arith.constant 12 : index
    %77 = memref.load %arg2[%c12] : memref<16xf32, #tpu.memory_space<smem>>
    %cst_33 = arith.constant 5.000000e-01 : f32
    %78 = arith.mulf %77, %cst_33 : f32
    %79 = vector.broadcast %78 : f32 to vector<16x16xf32>
    %80 = arith.mulf %1, %79 : vector<16x16xf32>
    %c13 = arith.constant 13 : index
    %81 = memref.load %arg2[%c13] : memref<16xf32, #tpu.memory_space<smem>>
    %cst_34 = arith.constant 5.000000e-01 : f32
    %82 = arith.mulf %81, %cst_34 : f32
    %83 = vector.broadcast %82 : f32 to vector<16x16xf32>
    %84 = arith.mulf %3, %83 : vector<16x16xf32>
    %85 = arith.addf %80, %84 : vector<16x16xf32>
    %c14 = arith.constant 14 : index
    %86 = memref.load %arg2[%c14] : memref<16xf32, #tpu.memory_space<smem>>
    %cst_35 = arith.constant 5.000000e-01 : f32
    %87 = arith.mulf %86, %cst_35 : f32
    %88 = vector.broadcast %87 : f32 to vector<16x16xf32>
    %89 = arith.mulf %5, %88 : vector<16x16xf32>
    %90 = arith.addf %85, %89 : vector<16x16xf32>
    %c15 = arith.constant 15 : index
    %91 = memref.load %arg2[%c15] : memref<16xf32, #tpu.memory_space<smem>>
    %cst_36 = arith.constant 5.000000e-01 : f32
    %92 = arith.mulf %91, %cst_36 : f32
    %93 = vector.broadcast %92 : f32 to vector<16x16xf32>
    %94 = arith.mulf %7, %93 : vector<16x16xf32>
    %95 = arith.addf %90, %94 : vector<16x16xf32>
    %c3_37 = arith.constant 3 : index
    %96 = memref.load %arg5[%c3_37] : memref<4xf32, #tpu.memory_space<smem>>
    %cst_38 = arith.constant 5.000000e-01 : f32
    %97 = arith.mulf %96, %cst_38 : f32
    %98 = vector.broadcast %97 : f32 to vector<16x16xf32>
    %99 = arith.addf %95, %98 : vector<16x16xf32>
    %100 = tpu.concatenate %30, %53, %76, %99 in 0 : vector<16x16xf32>, vector<16x16xf32>, vector<16x16xf32>, vector<16x16xf32> -> vector<64x16xf32>
    %c0_39 = arith.constant 0 : index
    %101 = memref.load %arg3[%c0_39] : memref<16xf32, #tpu.memory_space<smem>>
    %102 = vector.broadcast %101 : f32 to vector<16x16xf32>
    %103 = arith.mulf %1, %102 : vector<16x16xf32>
    %c1_40 = arith.constant 1 : index
    %104 = memref.load %arg3[%c1_40] : memref<16xf32, #tpu.memory_space<smem>>
    %105 = vector.broadcast %104 : f32 to vector<16x16xf32>
    %106 = arith.mulf %3, %105 : vector<16x16xf32>
    %107 = arith.addf %103, %106 : vector<16x16xf32>
    %c2_41 = arith.constant 2 : index
    %108 = memref.load %arg3[%c2_41] : memref<16xf32, #tpu.memory_space<smem>>
    %109 = vector.broadcast %108 : f32 to vector<16x16xf32>
    %110 = arith.mulf %5, %109 : vector<16x16xf32>
    %111 = arith.addf %107, %110 : vector<16x16xf32>
    %c3_42 = arith.constant 3 : index
    %112 = memref.load %arg3[%c3_42] : memref<16xf32, #tpu.memory_space<smem>>
    %113 = vector.broadcast %112 : f32 to vector<16x16xf32>
    %114 = arith.mulf %7, %113 : vector<16x16xf32>
    %115 = arith.addf %111, %114 : vector<16x16xf32>
    %c0_43 = arith.constant 0 : index
    %116 = memref.load %arg6[%c0_43] : memref<4xf32, #tpu.memory_space<smem>>
    %117 = vector.broadcast %116 : f32 to vector<16x16xf32>
    %118 = arith.addf %115, %117 : vector<16x16xf32>
    %c4_44 = arith.constant 4 : index
    %119 = memref.load %arg3[%c4_44] : memref<16xf32, #tpu.memory_space<smem>>
    %120 = vector.broadcast %119 : f32 to vector<16x16xf32>
    %121 = arith.mulf %1, %120 : vector<16x16xf32>
    %c5_45 = arith.constant 5 : index
    %122 = memref.load %arg3[%c5_45] : memref<16xf32, #tpu.memory_space<smem>>
    %123 = vector.broadcast %122 : f32 to vector<16x16xf32>
    %124 = arith.mulf %3, %123 : vector<16x16xf32>
    %125 = arith.addf %121, %124 : vector<16x16xf32>
    %c6_46 = arith.constant 6 : index
    %126 = memref.load %arg3[%c6_46] : memref<16xf32, #tpu.memory_space<smem>>
    %127 = vector.broadcast %126 : f32 to vector<16x16xf32>
    %128 = arith.mulf %5, %127 : vector<16x16xf32>
    %129 = arith.addf %125, %128 : vector<16x16xf32>
    %c7_47 = arith.constant 7 : index
    %130 = memref.load %arg3[%c7_47] : memref<16xf32, #tpu.memory_space<smem>>
    %131 = vector.broadcast %130 : f32 to vector<16x16xf32>
    %132 = arith.mulf %7, %131 : vector<16x16xf32>
    %133 = arith.addf %129, %132 : vector<16x16xf32>
    %c1_48 = arith.constant 1 : index
    %134 = memref.load %arg6[%c1_48] : memref<4xf32, #tpu.memory_space<smem>>
    %135 = vector.broadcast %134 : f32 to vector<16x16xf32>
    %136 = arith.addf %133, %135 : vector<16x16xf32>
    %c8_49 = arith.constant 8 : index
    %137 = memref.load %arg3[%c8_49] : memref<16xf32, #tpu.memory_space<smem>>
    %138 = vector.broadcast %137 : f32 to vector<16x16xf32>
    %139 = arith.mulf %1, %138 : vector<16x16xf32>
    %c9_50 = arith.constant 9 : index
    %140 = memref.load %arg3[%c9_50] : memref<16xf32, #tpu.memory_space<smem>>
    %141 = vector.broadcast %140 : f32 to vector<16x16xf32>
    %142 = arith.mulf %3, %141 : vector<16x16xf32>
    %143 = arith.addf %139, %142 : vector<16x16xf32>
    %c10_51 = arith.constant 10 : index
    %144 = memref.load %arg3[%c10_51] : memref<16xf32, #tpu.memory_space<smem>>
    %145 = vector.broadcast %144 : f32 to vector<16x16xf32>
    %146 = arith.mulf %5, %145 : vector<16x16xf32>
    %147 = arith.addf %143, %146 : vector<16x16xf32>
    %c11_52 = arith.constant 11 : index
    %148 = memref.load %arg3[%c11_52] : memref<16xf32, #tpu.memory_space<smem>>
    %149 = vector.broadcast %148 : f32 to vector<16x16xf32>
    %150 = arith.mulf %7, %149 : vector<16x16xf32>
    %151 = arith.addf %147, %150 : vector<16x16xf32>
    %c2_53 = arith.constant 2 : index
    %152 = memref.load %arg6[%c2_53] : memref<4xf32, #tpu.memory_space<smem>>
    %153 = vector.broadcast %152 : f32 to vector<16x16xf32>
    %154 = arith.addf %151, %153 : vector<16x16xf32>
    %c12_54 = arith.constant 12 : index
    %155 = memref.load %arg3[%c12_54] : memref<16xf32, #tpu.memory_space<smem>>
    %156 = vector.broadcast %155 : f32 to vector<16x16xf32>
    %157 = arith.mulf %1, %156 : vector<16x16xf32>
    %c13_55 = arith.constant 13 : index
    %158 = memref.load %arg3[%c13_55] : memref<16xf32, #tpu.memory_space<smem>>
    %159 = vector.broadcast %158 : f32 to vector<16x16xf32>
    %160 = arith.mulf %3, %159 : vector<16x16xf32>
    %161 = arith.addf %157, %160 : vector<16x16xf32>
    %c14_56 = arith.constant 14 : index
    %162 = memref.load %arg3[%c14_56] : memref<16xf32, #tpu.memory_space<smem>>
    %163 = vector.broadcast %162 : f32 to vector<16x16xf32>
    %164 = arith.mulf %5, %163 : vector<16x16xf32>
    %165 = arith.addf %161, %164 : vector<16x16xf32>
    %c15_57 = arith.constant 15 : index
    %166 = memref.load %arg3[%c15_57] : memref<16xf32, #tpu.memory_space<smem>>
    %167 = vector.broadcast %166 : f32 to vector<16x16xf32>
    %168 = arith.mulf %7, %167 : vector<16x16xf32>
    %169 = arith.addf %165, %168 : vector<16x16xf32>
    %c3_58 = arith.constant 3 : index
    %170 = memref.load %arg6[%c3_58] : memref<4xf32, #tpu.memory_space<smem>>
    %171 = vector.broadcast %170 : f32 to vector<16x16xf32>
    %172 = arith.addf %169, %171 : vector<16x16xf32>
    %173 = tpu.concatenate %118, %136, %154, %172 in 0 : vector<16x16xf32>, vector<16x16xf32>, vector<16x16xf32>, vector<16x16xf32> -> vector<64x16xf32>
    %c0_59 = arith.constant 0 : index
    %174 = memref.load %arg4[%c0_59] : memref<16xf32, #tpu.memory_space<smem>>
    %175 = vector.broadcast %174 : f32 to vector<16x16xf32>
    %176 = arith.mulf %1, %175 : vector<16x16xf32>
    %c1_60 = arith.constant 1 : index
    %177 = memref.load %arg4[%c1_60] : memref<16xf32, #tpu.memory_space<smem>>
    %178 = vector.broadcast %177 : f32 to vector<16x16xf32>
    %179 = arith.mulf %3, %178 : vector<16x16xf32>
    %180 = arith.addf %176, %179 : vector<16x16xf32>
    %c2_61 = arith.constant 2 : index
    %181 = memref.load %arg4[%c2_61] : memref<16xf32, #tpu.memory_space<smem>>
    %182 = vector.broadcast %181 : f32 to vector<16x16xf32>
    %183 = arith.mulf %5, %182 : vector<16x16xf32>
    %184 = arith.addf %180, %183 : vector<16x16xf32>
    %c3_62 = arith.constant 3 : index
    %185 = memref.load %arg4[%c3_62] : memref<16xf32, #tpu.memory_space<smem>>
    %186 = vector.broadcast %185 : f32 to vector<16x16xf32>
    %187 = arith.mulf %7, %186 : vector<16x16xf32>
    %188 = arith.addf %184, %187 : vector<16x16xf32>
    %c0_63 = arith.constant 0 : index
    %189 = memref.load %arg7[%c0_63] : memref<4xf32, #tpu.memory_space<smem>>
    %190 = vector.broadcast %189 : f32 to vector<16x16xf32>
    %191 = arith.addf %188, %190 : vector<16x16xf32>
    %c4_64 = arith.constant 4 : index
    %192 = memref.load %arg4[%c4_64] : memref<16xf32, #tpu.memory_space<smem>>
    %193 = vector.broadcast %192 : f32 to vector<16x16xf32>
    %194 = arith.mulf %1, %193 : vector<16x16xf32>
    %c5_65 = arith.constant 5 : index
    %195 = memref.load %arg4[%c5_65] : memref<16xf32, #tpu.memory_space<smem>>
    %196 = vector.broadcast %195 : f32 to vector<16x16xf32>
    %197 = arith.mulf %3, %196 : vector<16x16xf32>
    %198 = arith.addf %194, %197 : vector<16x16xf32>
    %c6_66 = arith.constant 6 : index
    %199 = memref.load %arg4[%c6_66] : memref<16xf32, #tpu.memory_space<smem>>
    %200 = vector.broadcast %199 : f32 to vector<16x16xf32>
    %201 = arith.mulf %5, %200 : vector<16x16xf32>
    %202 = arith.addf %198, %201 : vector<16x16xf32>
    %c7_67 = arith.constant 7 : index
    %203 = memref.load %arg4[%c7_67] : memref<16xf32, #tpu.memory_space<smem>>
    %204 = vector.broadcast %203 : f32 to vector<16x16xf32>
    %205 = arith.mulf %7, %204 : vector<16x16xf32>
    %206 = arith.addf %202, %205 : vector<16x16xf32>
    %c1_68 = arith.constant 1 : index
    %207 = memref.load %arg7[%c1_68] : memref<4xf32, #tpu.memory_space<smem>>
    %208 = vector.broadcast %207 : f32 to vector<16x16xf32>
    %209 = arith.addf %206, %208 : vector<16x16xf32>
    %c8_69 = arith.constant 8 : index
    %210 = memref.load %arg4[%c8_69] : memref<16xf32, #tpu.memory_space<smem>>
    %211 = vector.broadcast %210 : f32 to vector<16x16xf32>
    %212 = arith.mulf %1, %211 : vector<16x16xf32>
    %c9_70 = arith.constant 9 : index
    %213 = memref.load %arg4[%c9_70] : memref<16xf32, #tpu.memory_space<smem>>
    %214 = vector.broadcast %213 : f32 to vector<16x16xf32>
    %215 = arith.mulf %3, %214 : vector<16x16xf32>
    %216 = arith.addf %212, %215 : vector<16x16xf32>
    %c10_71 = arith.constant 10 : index
    %217 = memref.load %arg4[%c10_71] : memref<16xf32, #tpu.memory_space<smem>>
    %218 = vector.broadcast %217 : f32 to vector<16x16xf32>
    %219 = arith.mulf %5, %218 : vector<16x16xf32>
    %220 = arith.addf %216, %219 : vector<16x16xf32>
    %c11_72 = arith.constant 11 : index
    %221 = memref.load %arg4[%c11_72] : memref<16xf32, #tpu.memory_space<smem>>
    %222 = vector.broadcast %221 : f32 to vector<16x16xf32>
    %223 = arith.mulf %7, %222 : vector<16x16xf32>
    %224 = arith.addf %220, %223 : vector<16x16xf32>
    %c2_73 = arith.constant 2 : index
    %225 = memref.load %arg7[%c2_73] : memref<4xf32, #tpu.memory_space<smem>>
    %226 = vector.broadcast %225 : f32 to vector<16x16xf32>
    %227 = arith.addf %224, %226 : vector<16x16xf32>
    %c12_74 = arith.constant 12 : index
    %228 = memref.load %arg4[%c12_74] : memref<16xf32, #tpu.memory_space<smem>>
    %229 = vector.broadcast %228 : f32 to vector<16x16xf32>
    %230 = arith.mulf %1, %229 : vector<16x16xf32>
    %c13_75 = arith.constant 13 : index
    %231 = memref.load %arg4[%c13_75] : memref<16xf32, #tpu.memory_space<smem>>
    %232 = vector.broadcast %231 : f32 to vector<16x16xf32>
    %233 = arith.mulf %3, %232 : vector<16x16xf32>
    %234 = arith.addf %230, %233 : vector<16x16xf32>
    %c14_76 = arith.constant 14 : index
    %235 = memref.load %arg4[%c14_76] : memref<16xf32, #tpu.memory_space<smem>>
    %236 = vector.broadcast %235 : f32 to vector<16x16xf32>
    %237 = arith.mulf %5, %236 : vector<16x16xf32>
    %238 = arith.addf %234, %237 : vector<16x16xf32>
    %c15_77 = arith.constant 15 : index
    %239 = memref.load %arg4[%c15_77] : memref<16xf32, #tpu.memory_space<smem>>
    %240 = vector.broadcast %239 : f32 to vector<16x16xf32>
    %241 = arith.mulf %7, %240 : vector<16x16xf32>
    %242 = arith.addf %238, %241 : vector<16x16xf32>
    %c3_78 = arith.constant 3 : index
    %243 = memref.load %arg7[%c3_78] : memref<4xf32, #tpu.memory_space<smem>>
    %244 = vector.broadcast %243 : f32 to vector<16x16xf32>
    %245 = arith.addf %242, %244 : vector<16x16xf32>
    %246 = tpu.concatenate %191, %209, %227, %245 in 0 : vector<16x16xf32>, vector<16x16xf32>, vector<16x16xf32>, vector<16x16xf32> -> vector<64x16xf32>
    %cst_79 = arith.constant dense<0.000000e+00> : vector<64x64xf32>
    %247 = tpu.matmul %100, %173, %cst_79 {dimension_numbers = #tpu.dot_dimension_numbers<[1], [1], [0], [0], [0, 0, 1, 0], [], []>, precision = #tpu.contract_precision<fp32>} : vector<64x16xf32>, vector<64x16xf32>, vector<64x64xf32> -> vector<64x64xf32>
    %248 = tpu.iota {dimensions = array<i32: 0>} : vector<64x64xi32>
    %249 = tpu.iota {dimensions = array<i32: 1>} : vector<64x64xi32>
    %c4_i32 = arith.constant 4 : i32
    %250 = vector.broadcast %c4_i32 : i32 to vector<64x64xi32>
    %251 = arith.shrsi %248, %250 : vector<64x64xi32>
    %c4_i32_80 = arith.constant 4 : i32
    %252 = vector.broadcast %c4_i32_80 : i32 to vector<64x64xi32>
    %253 = arith.shrsi %249, %252 : vector<64x64xi32>
    %254 = arith.cmpi eq, %251, %253 : vector<64x64xi32>
    %cst_81 = arith.constant -1.000000e+30 : f32
    %255 = vector.broadcast %cst_81 : f32 to vector<64x64xf32>
    %256 = arith.select %254, %247, %255 : vector<64x64xi1>, vector<64x64xf32>
    %cst_82 = arith.constant dense<0xFF800000> : vector<64xf32>
    %257 = vector.multi_reduction <maximumf>, %256, %cst_82 [1] : vector<64x64xf32> to vector<64xf32>
    %258 = vector.shape_cast %257 : vector<64xf32> to vector<64x1xf32>
    %259 = vector.broadcast %258 : vector<64x1xf32> to vector<64x64xf32>
    %260 = arith.subf %256, %259 : vector<64x64xf32>
    %261 = math.exp %260 : vector<64x64xf32>
    %cst_83 = arith.constant dense<0.000000e+00> : vector<64xf32>
    %262 = vector.multi_reduction <add>, %261, %cst_83 [1] : vector<64x64xf32> to vector<64xf32>
    %263 = vector.shape_cast %262 : vector<64xf32> to vector<64x1xf32>
    %264 = tpu.reciprocal %263 : vector<64x1xf32> -> vector<64x1xf32>
    %265 = vector.broadcast %264 : vector<64x1xf32> to vector<64x64xf32>
    %266 = arith.mulf %261, %265 : vector<64x64xf32>
    %267 = tpu.transpose %246, [1, 0] : vector<64x16xf32> -> vector<16x64xf32>
    %cst_84 = arith.constant dense<0.000000e+00> : vector<16x64xf32>
    %268 = tpu.matmul %267, %266, %cst_84 {dimension_numbers = #tpu.dot_dimension_numbers<[1], [1], [0], [0], [0, 0, 1, 0], [], []>, precision = #tpu.contract_precision<fp32>} : vector<16x64xf32>, vector<64x64xf32>, vector<16x64xf32> -> vector<16x64xf32>
    %c0_85 = arith.constant 0 : index
    %c0_86 = arith.constant 0 : index
    %c0_87 = arith.constant 0 : index
    %269 = vector.load %arg8[%c0_85, %c0_86, %c0_87] : memref<1x16x64xf32, #tpu.memory_space<vmem>>, vector<1x16x64xf32>
    %270 = vector.shape_cast %269 : vector<1x16x64xf32> to vector<16x64xf32>
    %271 = vector.shape_cast %268 : vector<16x64xf32> to vector<1x16x64xf32>
    tpu.vector_store %arg8[%c0_85, %c0_86, %c0_87], %271 {strides = array<i32>} : memref<1x16x64xf32, #tpu.memory_space<vmem>>, vector<1x16x64xf32>,
    return
  }
  func.func @transform_0(%arg0: i32) -> (i32, i32, i32, i32) {
    %c0_i32 = arith.constant 0 : i32
    %c0_i32_0 = arith.constant 0 : i32
    %c0_i32_1 = arith.constant 0 : i32
    %c0_i32_2 = arith.constant 0 : i32
    return %arg0, %c0_i32, %c0_i32_0, %c0_i32_1 : i32, i32, i32, i32
  }
  func.func @transform_1(%arg0: i32) -> i32 {
    %c0_i32 = arith.constant 0 : i32
    %c0_i32_0 = arith.constant 0 : i32
    return %c0_i32 : i32
  }
  func.func @transform_2(%arg0: i32) -> i32 {
    %c0_i32 = arith.constant 0 : i32
    %c0_i32_0 = arith.constant 0 : i32
    return %c0_i32 : i32
  }
  func.func @transform_3(%arg0: i32) -> i32 {
    %c0_i32 = arith.constant 0 : i32
    %c0_i32_0 = arith.constant 0 : i32
    return %c0_i32 : i32
  }
  func.func @transform_4(%arg0: i32) -> i32 {
    %c0_i32 = arith.constant 0 : i32
    %c0_i32_0 = arith.constant 0 : i32
    return %c0_i32 : i32
  }
  func.func @transform_5(%arg0: i32) -> i32 {
    %c0_i32 = arith.constant 0 : i32
    %c0_i32_0 = arith.constant 0 : i32
    return %c0_i32 : i32
  }
  func.func @transform_6(%arg0: i32) -> i32 {
    %c0_i32 = arith.constant 0 : i32
    %c0_i32_0 = arith.constant 0 : i32
    return %c0_i32 : i32
  }
  func.func @transform_7(%arg0: i32) -> (i32, i32, i32) {
    %c0_i32 = arith.constant 0 : i32
    %c0_i32_0 = arith.constant 0 : i32
    %c0_i32_1 = arith.constant 0 : i32
    return %arg0, %c0_i32, %c0_i32_0 : i32, i32, i32
  }
}

</mosaic_0001>

<llo_original>
// kernel: tpu_custom_call.1
$region0: #{tpu_custom_call.1}
  #allocation0 [shape = 'u32[]', space=smem, size = 0x4, offset = 0x4, fixed_abs, tag = 'smem constant byte address 0x4 - core index']
  #allocation1 [shape = 'u32[144,128]{1,0:T(1,128)}', space=vmem, size = 0x12000, scoped, tag = 'internal scratch']
  %s0 = inlined_call_operand.hbm [shape: f32[2,4,16,16], index: 0, kind: input, shape index: {}]
  %s1 = inlined_call_operand.vmem [shape: f32[16], index: 1, kind: input, shape index: {}]
  %s2 = inlined_call_operand.vmem [shape: f32[16], index: 2, kind: input, shape index: {}]
  %s3 = inlined_call_operand.vmem [shape: f32[16], index: 3, kind: input, shape index: {}]
  %s4 = inlined_call_operand.vmem [shape: f32[4], index: 4, kind: input, shape index: {}]
  %s5 = inlined_call_operand.vmem [shape: f32[4], index: 5, kind: input, shape index: {}]
  %s6 = inlined_call_operand.vmem [shape: f32[4], index: 6, kind: input, shape index: {}]
  %s7 = inlined_call_operand.hbm [shape: f32[2,16,64], index: 7, kind: output, shape index: {}]
  %s8 = sld [smem:[#allocation0]]
  $region89: #{tpu_custom_call.1} parent=0
    _
  %s10 = ssub.s32 1, %s8
  %s11 = scalar_select 0, %s10, %s8
  $region1: #{tpu_custom_call.1} parent=0
    #allocation2 [shape = 'u8[65536]{0}', space=vmem, size = 0x10000, scoped, tag = 'input window, operand 0']
    #allocation3 [shape = 's32[2]{0}', space=sflag, size = 0x8, scoped, tag = 'scoped memory for tpu_custom_call.1']
    #allocation4 [shape = 's32[2]{0}', space=sflag, size = 0x8, scoped, tag = 'scoped memory for tpu_custom_call.1']
    #allocation5 [shape = 's32[2]{0}', space=sflag, size = 0x8, scoped, tag = 'scoped memory for tpu_custom_call.1']
    #allocation6 [shape = 'u8[512]{0}', space=smem, size = 0x200, scoped, tag = 'input window, operand 1, single buffered']
    #allocation7 [shape = 'u8[512]{0}', space=smem, size = 0x200, scoped, tag = 'input window, operand 2, single buffered']
    #allocation8 [shape = 's32[1]{0}', space=sflag, size = 0x4, scoped, tag = 'scoped memory for tpu_custom_call.1']
    #allocation9 [shape = 'u8[512]{0}', space=smem, size = 0x200, scoped, tag = 'input window, operand 3, single buffered']
    #allocation10 [shape = 'u8[512]{0}', space=smem, size = 0x200, scoped, tag = 'input window, operand 4, single buffered']
    #allocation11 [shape = 's32[1]{0}', space=sflag, size = 0x4, scoped, tag = 'scoped memory for tpu_custom_call.1']
    #allocation12 [shape = 'u8[512]{0}', space=smem, size = 0x200, scoped, tag = 'input window, operand 5, single buffered']
    #allocation13 [shape = 'u8[512]{0}', space=smem, size = 0x200, scoped, tag = 'input window, operand 6, single buffered']
    #allocation14 [shape = 's32[1]{0}', space=sflag, size = 0x4, scoped, tag = 'scoped memory for tpu_custom_call.1']
    #allocation15 [shape = 'u8[16384]{0}', space=vmem, size = 0x4000, scoped, tag = 'output window, operand 0']
    %12 = vsyncpa [#allocation3], 0
    %s13 = scalar_lea.sflag [#allocation3], 1
    %14 = vsyncpa %s13, 0
    %15 = vsyncpa [#allocation5], 0
    %16 = vsyncpa [#allocation8], 0
    %17 = vsyncpa [#allocation11], 0
    %18 = vsyncpa [#allocation14], 0
    %19 = vsyncpa [#allocation4], 0
    %s20 = scalar_lea.sflag [#allocation4], 1
    %21 = vsyncpa %s20, 0
    loop: start=0, step=1, limit=4
    $region2: #{tpu_custom_call.1} parent=1 // loop_pre_header
      _
    $region3: #{tpu_custom_call.1} parent=1 // loop_header
      %s23 = sphi 0, %s27
      %p24 = scmp.ge.s32.totalorder %s23, 4
      %s33 = sphi 0, %s35
      %s36 = sphi 0, %s33
      %s37 = sphi 0, %s36
      %s53 = sphi 0, %s37
      %s57 = sphi 0, %s57
      %s59 = sphi 0, %s57
      %s60 = sphi 0, %s59
      %s74 = sphi 0, %s60
      %s78 = sphi 0, %s78
      %s80 = sphi 0, %s78
      %s81 = sphi 0, %s80
      %s95 = sphi 0, %s81
      %s99 = sphi 0, %s99
      %s101 = sphi 0, %s99
      %s102 = sphi 0, %s101
      %s116 = sphi 0, %s102
      %s120 = sphi 0, %s120
      %s122 = sphi 0, %s120
      %s123 = sphi 0, %s122
      %s137 = sphi 0, %s123
      %s141 = sphi 0, %s141
      %s143 = sphi 0, %s141
      %s144 = sphi 0, %s143
      %s158 = sphi 0, %s144
      %s162 = sphi 0, %s162
      %s164 = sphi 0, %s162
      %s165 = sphi 0, %s164
      %s179 = sphi 0, %s165
      %s185 = sphi 0, %s187
      %s188 = sphi 0, %s185
      %s189 = sphi 0, %s188
      %s205 = sphi 0, %s189
    $region4: #{tpu_custom_call.1} parent=1 // loop_header_branch
      %26 = sbr.rel (%p24) target = $region8
    $region5: #{tpu_custom_call.1} parent=1 // loop_body
      %s28 = ssub.s32 %s23, 1
      %s29 = ssub.s32 %s23, 2
      %s30 = sadd.s32 %s23, 1
      %s31 = ssub.s32 %s23, %s30
      %p32 = scmp.eq.s32.totalorder %s31, 0
      %s34 = sadd.s32 %s33, 1
      %s35 = scalar_select %p32, %s33, %s34
      %p38 = pneg %p32
      %p39 = scmp.eq.s32.totalorder %s23, 1
      %p40 = por %p38, %p39
      %p41 = scmp.ne.s32.totalorder %s33, %s36
      %p42 = scmp.eq.s32.totalorder %s23, 0
      %p43 = por %p41, %p42
      %p44 = scmp.ne.s32.totalorder %s33, %s36
      %p45 = scmp.eq.s32.totalorder %s28, 1
      %p46 = por %p44, %p45
      %p47 = scmp.ne.s32.totalorder %s36, %s37
      %p48 = scmp.eq.s32.totalorder %s28, 0
      %p49 = por %p47, %p48
      %p50 = scmp.ne.s32.totalorder %s36, %s37
      %p51 = scmp.eq.s32.totalorder %s29, 1
      %p52 = por %p50, %p51
      %p54 = scmp.ne.s32.totalorder %s37, %s53
      %p55 = scmp.eq.s32.totalorder %s29, 0
      %p56 = por %p54, %p55
      %s58 = sadd.s32 %s57, 1
      %p61 = scmp.eq.s32.totalorder %s23, 1
      %p62 = scmp.ne.s32.totalorder %s57, %s59
      %p63 = scmp.eq.s32.totalorder %s23, 0
      %p64 = por %p62, %p63
      %p65 = scmp.ne.s32.totalorder %s57, %s59
      %p66 = scmp.eq.s32.totalorder %s28, 1
      %p67 = por %p65, %p66
      %p68 = scmp.ne.s32.totalorder %s59, %s60
      %p69 = scmp.eq.s32.totalorder %s28, 0
      %p70 = por %p68, %p69
      %p71 = scmp.ne.s32.totalorder %s59, %s60
      %p72 = scmp.eq.s32.totalorder %s29, 1
      %p73 = por %p71, %p72
      %p75 = scmp.ne.s32.totalorder %s60, %s74
      %p76 = scmp.eq.s32.totalorder %s29, 0
      %p77 = por %p75, %p76
      %s79 = sadd.s32 %s78, 1
      %p82 = scmp.eq.s32.totalorder %s23, 1
      %p83 = scmp.ne.s32.totalorder %s78, %s80
      %p84 = scmp.eq.s32.totalorder %s23, 0
      %p85 = por %p83, %p84
      %p86 = scmp.ne.s32.totalorder %s78, %s80
      %p87 = scmp.eq.s32.totalorder %s28, 1
      %p88 = por %p86, %p87
      %p89 = scmp.ne.s32.totalorder %s80, %s81
      %p90 = scmp.eq.s32.totalorder %s28, 0
      %p91 = por %p89, %p90
      %p92 = scmp.ne.s32.totalorder %s80, %s81
      %p93 = scmp.eq.s32.totalorder %s29, 1
      %p94 = por %p92, %p93
      %p96 = scmp.ne.s32.totalorder %s81, %s95
      %p97 = scmp.eq.s32.totalorder %s29, 0
      %p98 = por %p96, %p97
      %s100 = sadd.s32 %s99, 1
      %p103 = scmp.eq.s32.totalorder %s23, 1
      %p104 = scmp.ne.s32.totalorder %s99, %s101
      %p105 = scmp.eq.s32.totalorder %s23, 0
      %p106 = por %p104, %p105
      %p107 = scmp.ne.s32.totalorder %s99, %s101
      %p108 = scmp.eq.s32.totalorder %s28, 1
      %p109 = por %p107, %p108
      %p110 = scmp.ne.s32.totalorder %s101, %s102
      %p111 = scmp.eq.s32.totalorder %s28, 0
      %p112 = por %p110, %p111
      %p113 = scmp.ne.s32.totalorder %s101, %s102
      %p114 = scmp.eq.s32.totalorder %s29, 1
      %p115 = por %p113, %p114
      %p117 = scmp.ne.s32.totalorder %s102, %s116
      %p118 = scmp.eq.s32.totalorder %s29, 0
      %p119 = por %p117, %p118
      %s121 = sadd.s32 %s120, 1
      %p124 = scmp.eq.s32.totalorder %s23, 1
      %p125 = scmp.ne.s32.totalorder %s120, %s122
      %p126 = scmp.eq.s32.totalorder %s23, 0
      %p127 = por %p125, %p126
      %p128 = scmp.ne.s32.totalorder %s120, %s122
      %p129 = scmp.eq.s32.totalorder %s28, 1
      %p130 = por %p128, %p129
      %p131 = scmp.ne.s32.totalorder %s122, %s123
      %p132 = scmp.eq.s32.totalorder %s28, 0
      %p133 = por %p131, %p132
      %p134 = scmp.ne.s32.totalorder %s122, %s123
      %p135 = scmp.eq.s32.totalorder %s29, 1
      %p136 = por %p134, %p135
      %p138 = scmp.ne.s32.totalorder %s123, %s137
      %p139 = scmp.eq.s32.totalorder %s29, 0
      %p140 = por %p138, %p139
      %s142 = sadd.s32 %s141, 1
      %p145 = scmp.eq.s32.totalorder %s23, 1
      %p146 = scmp.ne.s32.totalorder %s141, %s143
      %p147 = scmp.eq.s32.totalorder %s23, 0
      %p148 = por %p146, %p147
      %p149 = scmp.ne.s32.totalorder %s141, %s143
      %p150 = scmp.eq.s32.totalorder %s28, 1
      %p151 = por %p149, %p150
      %p152 = scmp.ne.s32.totalorder %s143, %s144
      %p153 = scmp.eq.s32.totalorder %s28, 0
      %p154 = por %p152, %p153
      %p155 = scmp.ne.s32.totalorder %s143, %s144
      %p156 = scmp.eq.s32.totalorder %s29, 1
      %p157 = por %p155, %p156
      %p159 = scmp.ne.s32.totalorder %s144, %s158
      %p160 = scmp.eq.s32.totalorder %s29, 0
      %p161 = por %p159, %p160
      %s163 = sadd.s32 %s162, 1
      %p166 = scmp.eq.s32.totalorder %s23, 1
      %p167 = scmp.ne.s32.totalorder %s162, %s164
      %p168 = scmp.eq.s32.totalorder %s23, 0
      %p169 = por %p167, %p168
      %p170 = scmp.ne.s32.totalorder %s162, %s164
      %p171 = scmp.eq.s32.totalorder %s28, 1
      %p172 = por %p170, %p171
      %p173 = scmp.ne.s32.totalorder %s164, %s165
      %p174 = scmp.eq.s32.totalorder %s28, 0
      %p175 = por %p173, %p174
      %p176 = scmp.ne.s32.totalorder %s164, %s165
      %p177 = scmp.eq.s32.totalorder %s29, 1
      %p178 = por %p176, %p177
      %p180 = scmp.ne.s32.totalorder %s165, %s179
      %p181 = scmp.eq.s32.totalorder %s29, 0
      %p182 = por %p180, %p181
      %s183 = ssub.s32 %s23, %s30
      %p184 = scmp.eq.s32.totalorder %s183, 0
      %s186 = sadd.s32 %s185, 1
      %s187 = scalar_select %p184, %s185, %s186
      %p190 = pneg %p184
      %p191 = scmp.eq.s32.totalorder %s23, 1
      %p192 = por %p190, %p191
      %p193 = scmp.ne.s32.totalorder %s185, %s188
      %p194 = scmp.eq.s32.totalorder %s23, 0
      %p195 = por %p193, %p194
      %p196 = scmp.ne.s32.totalorder %s185, %s188
      %p197 = scmp.eq.s32.totalorder %s28, 1
      %p198 = por %p196, %p197
      %p199 = scmp.ne.s32.totalorder %s188, %s189
      %p200 = scmp.eq.s32.totalorder %s28, 0
      %p201 = por %p199, %p200
      %p202 = scmp.ne.s32.totalorder %s188, %s189
      %p203 = scmp.eq.s32.totalorder %s29, 1
      %p204 = por %p202, %p203
      %p206 = scmp.ne.s32.totalorder %s189, %s205
      %p207 = scmp.eq.s32.totalorder %s29, 0
      %p208 = por %p206, %p207
      %p209 = scmp.le.s32.totalorder 1, %s23
      %p210 = scmp.lt.s32.totalorder %s23, 3
      %p211 = pnand %p209, %p210
      %p212 = pneg %p211
      // Predicated region
      $region9: #{tpu_custom_call.1} parent=5 // pred_check
        _
      $region10: #{tpu_custom_call.1} parent=5 // pred_check_branch
        %214 = sbr.rel (%p211) target = $region12
      $region11: #{tpu_custom_call.1} parent=5 // pred_region
        %s215 = ssub.s32 %s23, 1
        // Predicated region
        $region13: #{tpu_custom_call.1} parent=11 // pred_check
          %p216 = pneg %p70
        $region14: #{tpu_custom_call.1} parent=11 // pred_check_branch
          %218 = sbr.rel (%p216) target = $region16
        $region15: #{tpu_custom_call.1} parent=11 // pred_region
          %s220 = ssub.s32 16, 16
          %221 = vsyncadd [#allocation5], %s220
          %s223 = sshll.u32 %s1, 4
          %s224 = int_to_ptr.vmem [resolvable:$true] %s223
          %226 = dma.vmem_to_smem %s224, 16, [#allocation6], [#allocation5]
        $region16: #{tpu_custom_call.1} parent=11 // pred_fallthru
          _
        // Predicated region
        $region17: #{tpu_custom_call.1} parent=11 // pred_check
          %p227 = pneg %p91
        $region18: #{tpu_custom_call.1} parent=11 // pred_check_branch
          %229 = sbr.rel (%p227) target = $region20
        $region19: #{tpu_custom_call.1} parent=11 // pred_region
          %s231 = ssub.s32 16, 16
          %232 = vsyncadd [#allocation8], %s231
          %s234 = sshll.u32 %s2, 4
          %s235 = int_to_ptr.vmem [resolvable:$true] %s234
          %237 = dma.vmem_to_smem %s235, 16, [#allocation7], [#allocation8]
        $region20: #{tpu_custom_call.1} parent=11 // pred_fallthru
          _
        // Predicated region
        $region21: #{tpu_custom_call.1} parent=11 // pred_check
          %p238 = pneg %p112
        $region22: #{tpu_custom_call.1} parent=11 // pred_check_branch
          %240 = sbr.rel (%p238) target = $region24
        $region23: #{tpu_custom_call.1} parent=11 // pred_region
          %s242 = ssub.s32 16, 16
          %243 = vsyncadd [#allocation8], %s242
          %s245 = sshll.u32 %s3, 4
          %s246 = int_to_ptr.vmem [resolvable:$true] %s245
          %248 = dma.vmem_to_smem %s246, 16, [#allocation9], [#allocation8]
        $region24: #{tpu_custom_call.1} parent=11 // pred_fallthru
          _
        // Predicated region
        $region25: #{tpu_custom_call.1} parent=11 // pred_check
          %p249 = pneg %p133
        $region26: #{tpu_custom_call.1} parent=11 // pred_check_branch
          %251 = sbr.rel (%p249) target = $region28
        $region27: #{tpu_custom_call.1} parent=11 // pred_region
          %s253 = ssub.s32 16, 16
          %254 = vsyncadd [#allocation11], %s253
          %s256 = sshll.u32 %s4, 4
          %s257 = int_to_ptr.vmem [resolvable:$true] %s256
          %259 = dma.vmem_to_smem %s257, 16, [#allocation10], [#allocation11]
        $region28: #{tpu_custom_call.1} parent=11 // pred_fallthru
          _
        // Predicated region
        $region29: #{tpu_custom_call.1} parent=11 // pred_check
          %p260 = pneg %p154
        $region30: #{tpu_custom_call.1} parent=11 // pred_check_branch
          %262 = sbr.rel (%p260) target = $region32
        $region31: #{tpu_custom_call.1} parent=11 // pred_region
          %s264 = ssub.s32 16, 16
          %265 = vsyncadd [#allocation11], %s264
          %s267 = sshll.u32 %s5, 4
          %s268 = int_to_ptr.vmem [resolvable:$true] %s267
          %270 = dma.vmem_to_smem %s268, 16, [#allocation12], [#allocation11]
        $region32: #{tpu_custom_call.1} parent=11 // pred_fallthru
          _
        // Predicated region
        $region33: #{tpu_custom_call.1} parent=11 // pred_check
          %p271 = pneg %p175
        $region34: #{tpu_custom_call.1} parent=11 // pred_check_branch
          %273 = sbr.rel (%p271) target = $region36
        $region35: #{tpu_custom_call.1} parent=11 // pred_region
          %s275 = ssub.s32 16, 16
          %276 = vsyncadd [#allocation14], %s275
          %s278 = sshll.u32 %s6, 4
          %s279 = int_to_ptr.vmem [resolvable:$true] %s278
          %281 = dma.vmem_to_smem %s279, 16, [#allocation13], [#allocation14]
        $region36: #{tpu_custom_call.1} parent=11 // pred_fallthru
          _
      $region12: #{tpu_custom_call.1} parent=5 // pred_fallthru
        _
      %p282 = scmp.lt.s32.totalorder %s23, 2
      // Predicated region
      $region37: #{tpu_custom_call.1} parent=5 // pred_check
        %p283 = pneg %p282
      $region38: #{tpu_custom_call.1} parent=5 // pred_check_branch
        %285 = sbr.rel (%p283) target = $region40
      $region39: #{tpu_custom_call.1} parent=5 // pred_region
        // Predicated region
        $region41: #{tpu_custom_call.1} parent=39 // pred_check
          %p286 = pneg %p43
        $region42: #{tpu_custom_call.1} parent=39 // pred_check_branch
          %288 = sbr.rel (%p286) target = $region44
        $region43: #{tpu_custom_call.1} parent=39 // pred_region
          %s289 = sand.u32 %s33, 1
          %s290 = scalar_lea.sflag [#allocation3], %s289
          %s291 = sand.u32 %s33, 1
          %s292 = smul.addr %s291, 64
          %s293 = scalar_lea.vmem [#allocation2], %s292
          %s295 = ssub.s32 1024, 1024
          %296 = vsyncadd %s290, %s295
          %s297 = smul.addr %s23, 8
          %s298 = smul.addr %s297, 128
          %s299 = scalar_lea.hbm %s0, %s298
          %s300 = sshll.u32 %s293, 4
          %s301 = int_to_ptr.vmem [resolvable:$true] %s300
          %306 = dma.hbm_to_vmem [thread:$0]  %s299, 1024, %s301, %s290, 128, 128, 8
        $region44: #{tpu_custom_call.1} parent=39 // pred_fallthru
          _
      $region40: #{tpu_custom_call.1} parent=5 // pred_fallthru
        _
      %p307 = scmp.le.s32.totalorder 1, %s23
      %p308 = scmp.lt.s32.totalorder %s23, 3
      %p309 = pnand %p307, %p308
      %p310 = pneg %p309
      // Predicated region
      $region45: #{tpu_custom_call.1} parent=5 // pred_check
        _
      $region46: #{tpu_custom_call.1} parent=5 // pred_check_branch
        %312 = sbr.rel (%p309) target = $region48
      $region47: #{tpu_custom_call.1} parent=5 // pred_region
        %s313 = ssub.s32 %s23, 1
        %s314 = sand.u32 %s36, 1
        %s315 = scalar_lea.sflag [#allocation3], %s314
        %s316 = sand.u32 %s36, 1
        %s317 = smul.addr %s316, 64
        %s318 = scalar_lea.vmem [#allocation2], %s317
        // Predicated region
        $region49: #{tpu_custom_call.1} parent=47 // pred_check
          %p319 = pneg %p49
        $region50: #{tpu_custom_call.1} parent=47 // pred_check_branch
          %321 = sbr.rel (%p319) target = $region52
        $region51: #{tpu_custom_call.1} parent=47 // pred_region
          %322 = dma.done %s315, 1024
        $region52: #{tpu_custom_call.1} parent=47 // pred_fallthru
          _
        // Predicated region
        $region53: #{tpu_custom_call.1} parent=47 // pred_check
          %p323 = pneg %p70
        $region54: #{tpu_custom_call.1} parent=47 // pred_check_branch
          %325 = sbr.rel (%p323) target = $region56
        $region55: #{tpu_custom_call.1} parent=47 // pred_region
          %326 = dma.done [#allocation5], 16
        $region56: #{tpu_custom_call.1} parent=47 // pred_fallthru
          _
        // Predicated region
        $region57: #{tpu_custom_call.1} parent=47 // pred_check
          %p327 = pneg %p91
        $region58: #{tpu_custom_call.1} parent=47 // pred_check_branch
          %329 = sbr.rel (%p327) target = $region60
        $region59: #{tpu_custom_call.1} parent=47 // pred_region
          %330 = dma.done [#allocation8], 16
        $region60: #{tpu_custom_call.1} parent=47 // pred_fallthru
          _
        // Predicated region
        $region61: #{tpu_custom_call.1} parent=47 // pred_check
          %p331 = pneg %p112
        $region62: #{tpu_custom_call.1} parent=47 // pred_check_branch
          %333 = sbr.rel (%p331) target = $region64
        $region63: #{tpu_custom_call.1} parent=47 // pred_region
          %334 = dma.done [#allocation8], 16
        $region64: #{tpu_custom_call.1} parent=47 // pred_fallthru
          _
        // Predicated region
        $region65: #{tpu_custom_call.1} parent=47 // pred_check
          %p335 = pneg %p133
        $region66: #{tpu_custom_call.1} parent=47 // pred_check_branch
          %337 = sbr.rel (%p335) target = $region68
        $region67: #{tpu_custom_call.1} parent=47 // pred_region
          %338 = dma.done [#allocation11], 16
        $region68: #{tpu_custom_call.1} parent=47 // pred_fallthru
          _
        // Predicated region
        $region69: #{tpu_custom_call.1} parent=47 // pred_check
          %p339 = pneg %p154
        $region70: #{tpu_custom_call.1} parent=47 // pred_check_branch
          %341 = sbr.rel (%p339) target = $region72
        $region71: #{tpu_custom_call.1} parent=47 // pred_region
          %342 = dma.done [#allocation11], 16
        $region72: #{tpu_custom_call.1} parent=47 // pred_fallthru
          _
        // Predicated region
        $region73: #{tpu_custom_call.1} parent=47 // pred_check
          %p343 = pneg %p175
        $region74: #{tpu_custom_call.1} parent=47 // pred_check_branch
          %345 = sbr.rel (%p343) target = $region76
        $region75: #{tpu_custom_call.1} parent=47 // pred_region
          %346 = dma.done [#allocation14], 16
        $region76: #{tpu_custom_call.1} parent=47 // pred_fallthru
          _
        %347 = sfence
        %s348 = sand.u32 %s36, 1
        %s349 = scalar_lea.sflag [#allocation3], %s348
        %s350 = sand.u32 %s36, 1
        %s351 = smul.addr %s350, 64
        %s352 = scalar_lea.vmem [#allocation2], %s351
        %p353 = pneg %p49
        %p354 = pneg %p46
        %p355 = pneg %p70
        %p356 = pneg %p67
        %p357 = pneg %p91
        %p358 = pneg %p88
        %p359 = pneg %p112
        %p360 = pneg %p109
        %p361 = pneg %p133
        %p362 = pneg %p130
        %p363 = pneg %p154
        %p364 = pneg %p151
        %p365 = pneg %p175
        %p366 = pneg %p172
        %p367 = pneg %p201
        %p368 = pneg %p198
        %s369 = sand.u32 %s188, 1
        %s370 = scalar_lea.sflag [#allocation4], %s369
        %s371 = sand.u32 %s188, 1
        %s372 = smul.addr %s371, 16
        %s373 = scalar_lea.vmem [#allocation15], %s372
        %v374 = vld [vmem:[%s318] sm:$0xff]
        %v375 = vld [vmem:[%s318 + $0x8] sm:$0xff]
        %s376 = scalar_lea.vmem %s318, 16 [#allocation2]
        %v377 = vld [vmem:[%s376] sm:$0xff]
        %v378 = vld [vmem:[%s376 + $0x8] sm:$0xff]
        %s379 = scalar_lea.vmem %s318, 32 [#allocation2]
        %v380 = vld [vmem:[%s379] sm:$0xff]
        %v381 = vld [vmem:[%s379 + $0x8] sm:$0xff]
        %s382 = scalar_lea.vmem %s318, 48 [#allocation2]
        %v383 = vld [vmem:[%s382] sm:$0xff]
        %v384 = vld [vmem:[%s382 + $0x8] sm:$0xff]
        %s385 = sld [smem:[#allocation6]]
        %s386 = smul.f32 %s385, 0.5
        %v387 = vstv %s386
        %v388 = vmul.f32 %v374, %v387
        %v389 = vmul.f32 %v375, %v387
        %s390 = sld [smem:[#allocation6 + $0x1]]
        %s391 = smul.f32 %s390, 0.5
        %v392 = vstv %s391
        %v393 = vmul.f32 %v377, %v392
        %v394 = vmul.f32 %v378, %v392
        %v395 = vadd.f32 %v388, %v393
        %v396 = vadd.f32 %v389, %v394
        %s397 = sld [smem:[#allocation6 + $0x2]]
        %s398 = smul.f32 %s397, 0.5
        %v399 = vstv %s398
        %v400 = vmul.f32 %v380, %v399
        %v401 = vmul.f32 %v381, %v399
        %v402 = vadd.f32 %v395, %v400
        %v403 = vadd.f32 %v396, %v401
        %s404 = sld [smem:[#allocation6 + $0x3]]
        %s405 = smul.f32 %s404, 0.5
        %v406 = vstv %s405
        %v407 = vmul.f32 %v383, %v406
        %v408 = vmul.f32 %v384, %v406
        %v409 = vadd.f32 %v402, %v407
        %v410 = vadd.f32 %v403, %v408
        %s411 = sld [smem:[#allocation10]]
        %s412 = smul.f32 %s411, 0.5
        %v413 = vstv %s412
        %v414 = vadd.f32 %v409, %v413
        %v415 = vadd.f32 %v410, %v413
        %s416 = sld [smem:[#allocation6 + $0x4]]
        %s417 = smul.f32 %s416, 0.5
        %v418 = vstv %s417
        %v419 = vmul.f32 %v374, %v418
        %v420 = vmul.f32 %v375, %v418
        %s421 = sld [smem:[#allocation6 + $0x5]]
        %s422 = smul.f32 %s421, 0.5
        %v423 = vstv %s422
        %v424 = vmul.f32 %v377, %v423
        %v425 = vmul.f32 %v378, %v423
        %v426 = vadd.f32 %v419, %v424
        %v427 = vadd.f32 %v420, %v425
        %s428 = sld [smem:[#allocation6 + $0x6]]
        %s429 = smul.f32 %s428, 0.5
        %v430 = vstv %s429
        %v431 = vmul.f32 %v380, %v430
        %v432 = vmul.f32 %v381, %v430
        %v433 = vadd.f32 %v426, %v431
        %v434 = vadd.f32 %v427, %v432
        %s435 = sld [smem:[#allocation6 + $0x7]]
        %s436 = smul.f32 %s435, 0.5
        %v437 = vstv %s436
        %v438 = vmul.f32 %v383, %v437
        %v439 = vmul.f32 %v384, %v437
        %v440 = vadd.f32 %v433, %v438
        %v441 = vadd.f32 %v434, %v439
        %s442 = sld [smem:[#allocation10 + $0x1]]
        %s443 = smul.f32 %s442, 0.5
        %v444 = vstv %s443
        %v445 = vadd.f32 %v440, %v444
        %v446 = vadd.f32 %v441, %v444
        %s447 = sld [smem:[#allocation6 + $0x8]]
        %s448 = smul.f32 %s447, 0.5
        %v449 = vstv %s448
        %v450 = vmul.f32 %v374, %v449
        %v451 = vmul.f32 %v375, %v449
        %s452 = sld [smem:[#allocation6 + $0x9]]
        %s453 = smul.f32 %s452, 0.5
        %v454 = vstv %s453
        %v455 = vmul.f32 %v377, %v454
        %v456 = vmul.f32 %v378, %v454
        %v457 = vadd.f32 %v450, %v455
        %v458 = vadd.f32 %v451, %v456
        %s459 = sld [smem:[#allocation6 + $0xa]]
        %s460 = smul.f32 %s459, 0.5
        %v461 = vstv %s460
        %v462 = vmul.f32 %v380, %v461
        %v463 = vmul.f32 %v381, %v461
        %v464 = vadd.f32 %v457, %v462
        %v465 = vadd.f32 %v458, %v463
        %s466 = sld [smem:[#allocation6 + $0xb]]
        %s467 = smul.f32 %s466, 0.5
        %v468 = vstv %s467
        %v469 = vmul.f32 %v383, %v468
        %v470 = vmul.f32 %v384, %v468
        %v471 = vadd.f32 %v464, %v469
        %v472 = vadd.f32 %v465, %v470
        %s473 = sld [smem:[#allocation10 + $0x2]]
        %s474 = smul.f32 %s473, 0.5
        %v475 = vstv %s474
        %v476 = vadd.f32 %v471, %v475
        %v477 = vadd.f32 %v472, %v475
        %s478 = sld [smem:[#allocation6 + $0xc]]
        %s479 = smul.f32 %s478, 0.5
        %v480 = vstv %s479
        %v481 = vmul.f32 %v374, %v480
        %v482 = vmul.f32 %v375, %v480
        %s483 = sld [smem:[#allocation6 + $0xd]]
        %s484 = smul.f32 %s483, 0.5
        %v485 = vstv %s484
        %v486 = vmul.f32 %v377, %v485
        %v487 = vmul.f32 %v378, %v485
        %v488 = vadd.f32 %v481, %v486
        %v489 = vadd.f32 %v482, %v487
        %s490 = sld [smem:[#allocation6 + $0xe]]
        %s491 = smul.f32 %s490, 0.5
        %v492 = vstv %s491
        %v493 = vmul.f32 %v380, %v492
        %v494 = vmul.f32 %v381, %v492
        %v495 = vadd.f32 %v488, %v493
        %v496 = vadd.f32 %v489, %v494
        %s497 = sld [smem:[#allocation6 + $0xf]]
        %s498 = smul.f32 %s497, 0.5
        %v499 = vstv %s498
        %v500 = vmul.f32 %v383, %v499
        %v501 = vmul.f32 %v384, %v499
        %v502 = vadd.f32 %v495, %v500
        %v503 = vadd.f32 %v496, %v501
        %s504 = sld [smem:[#allocation10 + $0x3]]
        %s505 = smul.f32 %s504, 0.5
        %v506 = vstv %s505
        %v507 = vadd.f32 %v502, %v506
        %v508 = vadd.f32 %v503, %v506
        %s509 = sld [smem:[#allocation7]]
        %v510 = vstv %s509
        %v511 = vmul.f32 %v374, %v510
        %v512 = vmul.f32 %v375, %v510
        %s513 = sld [smem:[#allocation7 + $0x1]]
        %v514 = vstv %s513
        %v515 = vmul.f32 %v377, %v514
        %v516 = vmul.f32 %v378, %v514
        %v517 = vadd.f32 %v511, %v515
        %v518 = vadd.f32 %v512, %v516
        %s519 = sld [smem:[#allocation7 + $0x2]]
        %v520 = vstv %s519
        %v521 = vmul.f32 %v380, %v520
        %v522 = vmul.f32 %v381, %v520
        %v523 = vadd.f32 %v517, %v521
        %v524 = vadd.f32 %v518, %v522
        %s525 = sld [smem:[#allocation7 + $0x3]]
        %v526 = vstv %s525
        %v527 = vmul.f32 %v383, %v526
        %v528 = vmul.f32 %v384, %v526
        %v529 = vadd.f32 %v523, %v527
        %v530 = vadd.f32 %v524, %v528
        %s531 = sld [smem:[#allocation12]]
        %v532 = vstv %s531
        %v533 = vadd.f32 %v529, %v532
        %v534 = vadd.f32 %v530, %v532
        %s535 = sld [smem:[#allocation7 + $0x4]]
        %v536 = vstv %s535
        %v537 = vmul.f32 %v374, %v536
        %v538 = vmul.f32 %v375, %v536
        %s539 = sld [smem:[#allocation7 + $0x5]]
        %v540 = vstv %s539
        %v541 = vmul.f32 %v377, %v540
        %v542 = vmul.f32 %v378, %v540
        %v543 = vadd.f32 %v537, %v541
        %v544 = vadd.f32 %v538, %v542
        %s545 = sld [smem:[#allocation7 + $0x6]]
        %v546 = vstv %s545
        %v547 = vmul.f32 %v380, %v546
        %v548 = vmul.f32 %v381, %v546
        %v549 = vadd.f32 %v543, %v547
        %v550 = vadd.f32 %v544, %v548
        %s551 = sld [smem:[#allocation7 + $0x7]]
        %v552 = vstv %s551
        %v553 = vmul.f32 %v383, %v552
        %v554 = vmul.f32 %v384, %v552
        %v555 = vadd.f32 %v549, %v553
        %v556 = vadd.f32 %v550, %v554
        %s557 = sld [smem:[#allocation12 + $0x1]]
        %v558 = vstv %s557
        %v559 = vadd.f32 %v555, %v558
        %v560 = vadd.f32 %v556, %v558
        %s561 = sld [smem:[#allocation7 + $0x8]]
        %v562 = vstv %s561
        %v563 = vmul.f32 %v374, %v562
        %v564 = vmul.f32 %v375, %v562
        %s565 = sld [smem:[#allocation7 + $0x9]]
        %v566 = vstv %s565
        %v567 = vmul.f32 %v377, %v566
        %v568 = vmul.f32 %v378, %v566
        %v569 = vadd.f32 %v563, %v567
        %v570 = vadd.f32 %v564, %v568
        %s571 = sld [smem:[#allocation7 + $0xa]]
        %v572 = vstv %s571
        %v573 = vmul.f32 %v380, %v572
        %v574 = vmul.f32 %v381, %v572
        %v575 = vadd.f32 %v569, %v573
        %v576 = vadd.f32 %v570, %v574
        %s577 = sld [smem:[#allocation7 + $0xb]]
        %v578 = vstv %s577
        %v579 = vmul.f32 %v383, %v578
        %v580 = vmul.f32 %v384, %v578
        %v581 = vadd.f32 %v575, %v579
        %v582 = vadd.f32 %v576, %v580
        %s583 = sld [smem:[#allocation12 + $0x2]]
        %v584 = vstv %s583
        %v585 = vadd.f32 %v581, %v584
        %v586 = vadd.f32 %v582, %v584
        %s587 = sld [smem:[#allocation7 + $0xc]]
        %v588 = vstv %s587
        %v589 = vmul.f32 %v374, %v588
        %v590 = vmul.f32 %v375, %v588
        %s591 = sld [smem:[#allocation7 + $0xd]]
        %v592 = vstv %s591
        %v593 = vmul.f32 %v377, %v592
        %v594 = vmul.f32 %v378, %v592
        %v595 = vadd.f32 %v589, %v593
        %v596 = vadd.f32 %v590, %v594
        %s597 = sld [smem:[#allocation7 + $0xe]]
        %v598 = vstv %s597
        %v599 = vmul.f32 %v380, %v598
        %v600 = vmul.f32 %v381, %v598
        %v601 = vadd.f32 %v595, %v599
        %v602 = vadd.f32 %v596, %v600
        %s603 = sld [smem:[#allocation7 + $0xf]]
        %v604 = vstv %s603
        %v605 = vmul.f32 %v383, %v604
        %v606 = vmul.f32 %v384, %v604
        %v607 = vadd.f32 %v601, %v605
        %v608 = vadd.f32 %v602, %v606
        %s609 = sld [smem:[#allocation12 + $0x3]]
        %v610 = vstv %s609
        %v611 = vadd.f32 %v607, %v610
        %v612 = vadd.f32 %v608, %v610
        %s613 = sld [smem:[#allocation9]]
        %v614 = vstv %s613
        %v615 = vmul.f32 %v374, %v614
        %v616 = vmul.f32 %v375, %v614
        %s617 = sld [smem:[#allocation9 + $0x1]]
        %v618 = vstv %s617
        %v619 = vmul.f32 %v377, %v618
        %v620 = vmul.f32 %v378, %v618
        %v621 = vadd.f32 %v615, %v619
        %v622 = vadd.f32 %v616, %v620
        %s623 = sld [smem:[#allocation9 + $0x2]]
        %v624 = vstv %s623
        %v625 = vmul.f32 %v380, %v624
        %v626 = vmul.f32 %v381, %v624
        %v627 = vadd.f32 %v621, %v625
        %v628 = vadd.f32 %v622, %v626
        %s629 = sld [smem:[#allocation9 + $0x3]]
        %v630 = vstv %s629
        %v631 = vmul.f32 %v383, %v630
        %v632 = vmul.f32 %v384, %v630
        %v633 = vadd.f32 %v627, %v631
        %v634 = vadd.f32 %v628, %v632
        %s635 = sld [smem:[#allocation13]]
        %v636 = vstv %s635
        %v637 = vadd.f32 %v633, %v636
        %v638 = vadd.f32 %v634, %v636
        %s639 = sld [smem:[#allocation9 + $0x4]]
        %v640 = vstv %s639
        %v641 = vmul.f32 %v374, %v640
        %v642 = vmul.f32 %v375, %v640
        %s643 = sld [smem:[#allocation9 + $0x5]]
        %v644 = vstv %s643
        %v645 = vmul.f32 %v377, %v644
        %v646 = vmul.f32 %v378, %v644
        %v647 = vadd.f32 %v641, %v645
        %v648 = vadd.f32 %v642, %v646
        %s649 = sld [smem:[#allocation9 + $0x6]]
        %v650 = vstv %s649
        %v651 = vmul.f32 %v380, %v650
        %v652 = vmul.f32 %v381, %v650
        %v653 = vadd.f32 %v647, %v651
        %v654 = vadd.f32 %v648, %v652
        %s655 = sld [smem:[#allocation9 + $0x7]]
        %v656 = vstv %s655
        %v657 = vmul.f32 %v383, %v656
        %v658 = vmul.f32 %v384, %v656
        %v659 = vadd.f32 %v653, %v657
        %v660 = vadd.f32 %v654, %v658
        %s661 = sld [smem:[#allocation13 + $0x1]]
        %v662 = vstv %s661
        %v663 = vadd.f32 %v659, %v662
        %v664 = vadd.f32 %v660, %v662
        %s665 = sld [smem:[#allocation9 + $0x8]]
        %v666 = vstv %s665
        %v667 = vmul.f32 %v374, %v666
        %v668 = vmul.f32 %v375, %v666
        %s669 = sld [smem:[#allocation9 + $0x9]]
        %v670 = vstv %s669
        %v671 = vmul.f32 %v377, %v670
        %v672 = vmul.f32 %v378, %v670
        %v673 = vadd.f32 %v667, %v671
        %v674 = vadd.f32 %v668, %v672
        %s675 = sld [smem:[#allocation9 + $0xa]]
        %v676 = vstv %s675
        %v677 = vmul.f32 %v380, %v676
        %v678 = vmul.f32 %v381, %v676
        %v679 = vadd.f32 %v673, %v677
        %v680 = vadd.f32 %v674, %v678
        %s681 = sld [smem:[#allocation9 + $0xb]]
        %v682 = vstv %s681
        %v683 = vmul.f32 %v383, %v682
        %v684 = vmul.f32 %v384, %v682
        %v685 = vadd.f32 %v679, %v683
        %v686 = vadd.f32 %v680, %v684
        %s687 = sld [smem:[#allocation13 + $0x2]]
        %v688 = vstv %s687
        %v689 = vadd.f32 %v685, %v688
        %v690 = vadd.f32 %v686, %v688
        %s691 = sld [smem:[#allocation9 + $0xc]]
        %v692 = vstv %s691
        %v693 = vmul.f32 %v374, %v692
        %v694 = vmul.f32 %v375, %v692
        %s695 = sld [smem:[#allocation9 + $0xd]]
        %v696 = vstv %s695
        %v697 = vmul.f32 %v377, %v696
        %v698 = vmul.f32 %v378, %v696
        %v699 = vadd.f32 %v693, %v697
        %v700 = vadd.f32 %v694, %v698
        %s701 = sld [smem:[#allocation9 + $0xe]]
        %v702 = vstv %s701
        %v703 = vmul.f32 %v380, %v702
        %v704 = vmul.f32 %v381, %v702
        %v705 = vadd.f32 %v699, %v703
        %v706 = vadd.f32 %v700, %v704
        %s707 = sld [smem:[#allocation9 + $0xf]]
        %v708 = vstv %s707
        %v709 = vmul.f32 %v383, %v708
        %v710 = vmul.f32 %v384, %v708
        %v711 = vadd.f32 %v705, %v709
        %v712 = vadd.f32 %v706, %v710
        %s713 = sld [smem:[#allocation13 + $0x3]]
        %v714 = vstv %s713
        %v715 = vadd.f32 %v711, %v714
        %v716 = vadd.f32 %v712, %v714
        %vm717 = vcmask 130048
        %v719 = vsel %vm717, %v414, 0
        %v722 = vsel %vm717, %v415, 0
        %v725 = vsel %vm717, %v445, 0
        %v728 = vsel %vm717, %v446, 0
        %v731 = vsel %vm717, %v476, 0
        %v734 = vsel %vm717, %v477, 0
        %v737 = vsel %vm717, %v507, 0
        %v740 = vsel %vm717, %v508, 0
        %v743 = vsel %vm717, %v533, 0
        %v746 = vsel %vm717, %v534, 0
        %v749 = vsel %vm717, %v559, 0
        %v752 = vsel %vm717, %v560, 0
        %v755 = vsel %vm717, %v585, 0
        %v758 = vsel %vm717, %v586, 0
        %v761 = vsel %vm717, %v611, 0
        %v764 = vsel %vm717, %v612, 0
        %766 = vmatprep.subr.mxu0 0.0
        %v767 = vand.u32 %v743, 4294901760
        %768 = vmatpush1.xpose.msra.mxu0 %v767
        %769 = vmatprep.subr.mxu0 0.0
        %v770 = vand.u32 %v746, 4294901760
        %771 = vmatpush1.xpose.msra.mxu0 %v770
        %772 = vmatprep.subr.mxu0 0.0
        %v773 = vand.u32 %v749, 4294901760
        %774 = vmatpush1.xpose.msra.mxu0 %v773
        %775 = vmatprep.subr.mxu0 0.0
        %v776 = vand.u32 %v752, 4294901760
        %777 = vmatpush1.xpose.msra.mxu0 %v776
        %778 = vmatprep.subr.mxu0 0.0
        %v779 = vand.u32 %v755, 4294901760
        %780 = vmatpush1.xpose.msra.mxu0 %v779
        %781 = vmatprep.subr.mxu0 0.0
        %v782 = vand.u32 %v758, 4294901760
        %783 = vmatpush1.xpose.msra.mxu0 %v782
        %784 = vmatprep.subr.mxu0 0.0
        %v785 = vand.u32 %v761, 4294901760
        %786 = vmatpush1.xpose.msra.mxu0 %v785
        %787 = vmatprep.subr.mxu0 0.0
        %v788 = vand.u32 %v764, 4294901760
        %789 = vmatpush1.xpose.msra.mxu0 %v788
        %790 = vmatprep.subr.mxu0 0.0
        %791 = vmatpush1.xpose.msra.mxu0 0.0
        %792 = vmatprep.subr.mxu0 0.0
        %793 = vmatpush1.xpose.msra.mxu0 0.0
        %794 = vmatprep.subr.mxu0 0.0
        %795 = vmatpush1.xpose.msra.mxu0 0.0
        %796 = vmatprep.subr.mxu0 0.0
        %797 = vmatpush1.xpose.msra.mxu0 0.0
        %798 = vmatprep.subr.mxu0 0.0
        %799 = vmatpush1.xpose.msra.mxu0 0.0
        %800 = vmatprep.subr.mxu0 0.0
        %801 = vmatpush1.xpose.msra.mxu0 0.0
        %802 = vmatprep.subr.mxu0 0.0
        %803 = vmatpush1.xpose.msra.mxu0 0.0
        %804 = vmatprep.subr.mxu0 0.0
        %805 = vmatpush1.xpose.msra.mxu0 0.0
        %806 = vmatprep.subr.mxu0 0.0
        %807 = vmatpush1.xpose.msra.mxu0 0.0
        %808 = vmatprep.subr.mxu0 0.0
        %809 = vmatpush1.xpose.msra.mxu0 0.0
        %810 = vmatprep.subr.mxu0 0.0
        %811 = vmatpush1.xpose.msra.mxu0 0.0
        %812 = vmatprep.subr.mxu0 0.0
        %813 = vmatpush1.xpose.msra.mxu0 0.0
        %814 = vmatprep.subr.mxu0 0.0
        %815 = vmatpush1.xpose.msra.mxu0 0.0
        %816 = vmatprep.subr.mxu0 0.0
        %817 = vmatpush1.xpose.msra.mxu0 0.0
        %818 = vmatprep.subr.mxu0 0.0
        %819 = vmatpush1.xpose.msra.mxu0 0.0
        %820 = vmatprep.subr.mxu0 0.0
        %821 = vmatpush1.xpose.msra.mxu0 0.0
        %822 = vmatprep.subr.mxu0 0.0
        %823 = vmatpush1.xpose.msra.mxu0 0.0
        %824 = vmatprep.subr.mxu0 0.0
        %825 = vmatpush1.xpose.msra.mxu0 0.0
        %826 = vmatprep.subr.mxu0 0.0
        %827 = vmatpush1.xpose.msra.mxu0 0.0
        %828 = vmatprep.subr.mxu0 0.0
        %829 = vmatpush1.xpose.msra.mxu0 0.0
        %830 = vmatprep.subr.mxu0 0.0
        %831 = vmatpush1.xpose.msra.mxu0 0.0
        %832 = vmatprep.subr.mxu0 0.0
        %833 = vmatpush1.xpose.msra.mxu0 0.0
        %834 = vmatprep.subr.mxu0 0.0
        %835 = vmatpush1.xpose.msra.mxu0 0.0
        %836 = vmatprep.subr.mxu0 0.0
        %837 = vmatpush1.xpose.msra.mxu0 0.0
        %838 = vmatprep.mubr.f32.mxu0 0.0
        %v839 = vand.u32 %v719, 4294901760
        %v840 = vsub.f32 %v719, %v839
        %v841 = vand.u32 %v840, 4294901760
        %v842 = vsub.f32 %v840, %v841
        %v843 = vand.u32 %v842, 4294901760
        %844 = vmatmul.mubr.f32.gmra.mrb[0].mxu0 %v843
        %v845 = vpop.f32.mrb[0].mxu0
        %v846 = vadd.f32 0.0, %v845
        %v847 = vpop.f32.mrb[0].mxu0
        %848 = vmatprep.mubr.f32.mxu0 0.0
        %v849 = vand.u32 %v722, 4294901760
        %v850 = vsub.f32 %v722, %v849
        %v851 = vand.u32 %v850, 4294901760
        %v852 = vsub.f32 %v850, %v851
        %v853 = vand.u32 %v852, 4294901760
        %854 = vmatmul.mubr.f32.gmra.mrb[0].mxu0 %v853
        %v855 = vpop.f32.mrb[0].mxu0
        %v856 = vadd.f32 0.0, %v855
        %v857 = vpop.f32.mrb[0].mxu0
        %858 = vmatprep.mubr.f32.mxu0 0.0
        %v859 = vand.u32 %v725, 4294901760
        %v860 = vsub.f32 %v725, %v859
        %v861 = vand.u32 %v860, 4294901760
        %v862 = vsub.f32 %v860, %v861
        %v863 = vand.u32 %v862, 4294901760
        %864 = vmatmul.mubr.f32.gmra.mrb[0].mxu0 %v863
        %v865 = vpop.f32.mrb[0].mxu0
        %v866 = vadd.f32 0.0, %v865
        %v867 = vpop.f32.mrb[0].mxu0
        %868 = vmatprep.mubr.f32.mxu0 0.0
        %v869 = vand.u32 %v728, 4294901760
        %v870 = vsub.f32 %v728, %v869
        %v871 = vand.u32 %v870, 4294901760
        %v872 = vsub.f32 %v870, %v871
        %v873 = vand.u32 %v872, 4294901760
        %874 = vmatmul.mubr.f32.gmra.mrb[0].mxu0 %v873
        %v875 = vpop.f32.mrb[0].mxu0
        %v876 = vadd.f32 0.0, %v875
        %v877 = vpop.f32.mrb[0].mxu0
        %878 = vmatprep.mubr.f32.mxu0 0.0
        %v879 = vand.u32 %v731, 4294901760
        %v880 = vsub.f32 %v731, %v879
        %v881 = vand.u32 %v880, 4294901760
        %v882 = vsub.f32 %v880, %v881
        %v883 = vand.u32 %v882, 4294901760
        %884 = vmatmul.mubr.f32.gmra.mrb[0].mxu0 %v883
        %v885 = vpop.f32.mrb[0].mxu0
        %v886 = vadd.f32 0.0, %v885
        %v887 = vpop.f32.mrb[0].mxu0
        %888 = vmatprep.mubr.f32.mxu0 0.0
        %v889 = vand.u32 %v734, 4294901760
        %v890 = vsub.f32 %v734, %v889
        %v891 = vand.u32 %v890, 4294901760
        %v892 = vsub.f32 %v890, %v891
        %v893 = vand.u32 %v892, 4294901760
        %894 = vmatmul.mubr.f32.gmra.mrb[0].mxu0 %v893
        %v895 = vpop.f32.mrb[0].mxu0
        %v896 = vadd.f32 0.0, %v895
        %v897 = vpop.f32.mrb[0].mxu0
        %898 = vmatprep.mubr.f32.mxu0 0.0
        %v899 = vand.u32 %v737, 4294901760
        %v900 = vsub.f32 %v737, %v899
        %v901 = vand.u32 %v900, 4294901760
        %v902 = vsub.f32 %v900, %v901
        %v903 = vand.u32 %v902, 4294901760
        %904 = vmatmul.mubr.f32.gmra.mrb[0].mxu0 %v903
        %v905 = vpop.f32.mrb[0].mxu0
        %v906 = vadd.f32 0.0, %v905
        %v907 = vpop.f32.mrb[0].mxu0
        %908 = vmatprep.mubr.f32.mxu0 0.0
        %v909 = vand.u32 %v740, 4294901760
        %v910 = vsub.f32 %v740, %v909
        %v911 = vand.u32 %v910, 4294901760
        %v912 = vsub.f32 %v910, %v911
        %v913 = vand.u32 %v912, 4294901760
        %914 = vmatmul.mubr.f32.gmra.mrb[0].mxu0 %v913
        %v915 = vpop.f32.mrb[0].mxu0
        %v916 = vadd.f32 0.0, %v915
        %v917 = vpop.f32.mrb[0].mxu0
        %918 = vdwg.mxu0
        %919 = vmatprep.subr.mxu0 0.0
        %v920 = vand.u32 %v743, 4294901760
        %v921 = vsub.f32 %v743, %v920
        %v922 = vand.u32 %v921, 4294901760
        %v923 = vsub.f32 %v921, %v922
        %v924 = vand.u32 %v923, 4294901760
        %925 = vmatpush1.xpose.msra.mxu0 %v924
        %926 = vmatprep.subr.mxu0 0.0
        %v927 = vand.u32 %v746, 4294901760
        %v928 = vsub.f32 %v746, %v927
        %v929 = vand.u32 %v928, 4294901760
        %v930 = vsub.f32 %v928, %v929
        %v931 = vand.u32 %v930, 4294901760
        %932 = vmatpush1.xpose.msra.mxu0 %v931
        %933 = vmatprep.subr.mxu0 0.0
        %v934 = vand.u32 %v749, 4294901760
        %v935 = vsub.f32 %v749, %v934
        %v936 = vand.u32 %v935, 4294901760
        %v937 = vsub.f32 %v935, %v936
        %v938 = vand.u32 %v937, 4294901760
        %939 = vmatpush1.xpose.msra.mxu0 %v938
        %940 = vmatprep.subr.mxu0 0.0
        %v941 = vand.u32 %v752, 4294901760
        %v942 = vsub.f32 %v752, %v941
        %v943 = vand.u32 %v942, 4294901760
        %v944 = vsub.f32 %v942, %v943
        %v945 = vand.u32 %v944, 4294901760
        %946 = vmatpush1.xpose.msra.mxu0 %v945
        %947 = vmatprep.subr.mxu0 0.0
        %v948 = vand.u32 %v755, 4294901760
        %v949 = vsub.f32 %v755, %v948
        %v950 = vand.u32 %v949, 4294901760
        %v951 = vsub.f32 %v949, %v950
        %v952 = vand.u32 %v951, 4294901760
        %953 = vmatpush1.xpose.msra.mxu0 %v952
        %954 = vmatprep.subr.mxu0 0.0
        %v955 = vand.u32 %v758, 4294901760
        %v956 = vsub.f32 %v758, %v955
        %v957 = vand.u32 %v956, 4294901760
        %v958 = vsub.f32 %v956, %v957
        %v959 = vand.u32 %v958, 4294901760
        %960 = vmatpush1.xpose.msra.mxu0 %v959
        %961 = vmatprep.subr.mxu0 0.0
        %v962 = vand.u32 %v761, 4294901760
        %v963 = vsub.f32 %v761, %v962
        %v964 = vand.u32 %v963, 4294901760
        %v965 = vsub.f32 %v963, %v964
        %v966 = vand.u32 %v965, 4294901760
        %967 = vmatpush1.xpose.msra.mxu0 %v966
        %968 = vmatprep.subr.mxu0 0.0
        %v969 = vand.u32 %v764, 4294901760
        %v970 = vsub.f32 %v764, %v969
        %v971 = vand.u32 %v970, 4294901760
        %v972 = vsub.f32 %v970, %v971
        %v973 = vand.u32 %v972, 4294901760
        %974 = vmatpush1.xpose.msra.mxu0 %v973
        %975 = vmatprep.subr.mxu0 0.0
        %976 = vmatpush1.xpose.msra.mxu0 0.0
        %977 = vmatprep.subr.mxu0 0.0
        %978 = vmatpush1.xpose.msra.mxu0 0.0
        %979 = vmatprep.subr.mxu0 0.0
        %980 = vmatpush1.xpose.msra.mxu0 0.0
        %981 = vmatprep.subr.mxu0 0.0
        %982 = vmatpush1.xpose.msra.mxu0 0.0
        %983 = vmatprep.subr.mxu0 0.0
        %984 = vmatpush1.xpose.msra.mxu0 0.0
        %985 = vmatprep.subr.mxu0 0.0
        %986 = vmatpush1.xpose.msra.mxu0 0.0
        %987 = vmatprep.subr.mxu0 0.0
        %988 = vmatpush1.xpose.msra.mxu0 0.0
        %989 = vmatprep.subr.mxu0 0.0
        %990 = vmatpush1.xpose.msra.mxu0 0.0
        %991 = vmatprep.subr.mxu0 0.0
        %992 = vmatpush1.xpose.msra.mxu0 0.0
        %993 = vmatprep.subr.mxu0 0.0
        %994 = vmatpush1.xpose.msra.mxu0 0.0
        %995 = vmatprep.subr.mxu0 0.0
        %996 = vmatpush1.xpose.msra.mxu0 0.0
        %997 = vmatprep.subr.mxu0 0.0
        %998 = vmatpush1.xpose.msra.mxu0 0.0
        %999 = vmatprep.subr.mxu0 0.0
        %1000 = vmatpush1.xpose.msra.mxu0 0.0
        %1001 = vmatprep.subr.mxu0 0.0
        %1002 = vmatpush1.xpose.msra.mxu0 0.0
        %1003 = vmatprep.subr.mxu0 0.0
        %1004 = vmatpush1.xpose.msra.mxu0 0.0
        %1005 = vmatprep.subr.mxu0 0.0
        %1006 = vmatpush1.xpose.msra.mxu0 0.0
        %1007 = vmatprep.subr.mxu0 0.0
        %1008 = vmatpush1.xpose.msra.mxu0 0.0
        %1009 = vmatprep.subr.mxu0 0.0
        %1010 = vmatpush1.xpose.msra.mxu0 0.0
        %1011 = vmatprep.subr.mxu0 0.0
        %1012 = vmatpush1.xpose.msra.mxu0 0.0
        %1013 = vmatprep.subr.mxu0 0.0
        %1014 = vmatpush1.xpose.msra.mxu0 0.0
        %1015 = vmatprep.subr.mxu0 0.0
        %1016 = vmatpush1.xpose.msra.mxu0 0.0
        %1017 = vmatprep.subr.mxu0 0.0
        %1018 = vmatpush1.xpose.msra.mxu0 0.0
        %1019 = vmatprep.subr.mxu0 0.0
        %1020 = vmatpush1.xpose.msra.mxu0 0.0
        %1021 = vmatprep.subr.mxu0 0.0
        %1022 = vmatpush1.xpose.msra.mxu0 0.0
        %1023 = vmatprep.mubr.f32.mxu0 0.0
        %v1024 = vand.u32 %v719, 4294901760
        %1025 = vmatmul.mubr.f32.gmra.mrb[0].mxu0 %v1024
        %v1026 = vpop.f32.mrb[0].mxu0
        %v1027 = vadd.f32 %v846, %v1026
        %v1028 = vpop.f32.mrb[0].mxu0
        %1029 = vmatprep.mubr.f32.mxu0 0.0
        %v1030 = vand.u32 %v722, 4294901760
        %1031 = vmatmul.mubr.f32.gmra.mrb[0].mxu0 %v1030
        %v1032 = vpop.f32.mrb[0].mxu0
        %v1033 = vadd.f32 %v856, %v1032
        %v1034 = vpop.f32.mrb[0].mxu0
        %1035 = vmatprep.mubr.f32.mxu0 0.0
        %v1036 = vand.u32 %v725, 4294901760
        %1037 = vmatmul.mubr.f32.gmra.mrb[0].mxu0 %v1036
        %v1038 = vpop.f32.mrb[0].mxu0
        %v1039 = vadd.f32 %v866, %v1038
        %v1040 = vpop.f32.mrb[0].mxu0
        %1041 = vmatprep.mubr.f32.mxu0 0.0
        %v1042 = vand.u32 %v728, 4294901760
        %1043 = vmatmul.mubr.f32.gmra.mrb[0].mxu0 %v1042
        %v1044 = vpop.f32.mrb[0].mxu0
        %v1045 = vadd.f32 %v876, %v1044
        %v1046 = vpop.f32.mrb[0].mxu0
        %1047 = vmatprep.mubr.f32.mxu0 0.0
        %v1048 = vand.u32 %v731, 4294901760
        %1049 = vmatmul.mubr.f32.gmra.mrb[0].mxu0 %v1048
        %v1050 = vpop.f32.mrb[0].mxu0
        %v1051 = vadd.f32 %v886, %v1050
        %v1052 = vpop.f32.mrb[0].mxu0
        %1053 = vmatprep.mubr.f32.mxu0 0.0
        %v1054 = vand.u32 %v734, 4294901760
        %1055 = vmatmul.mubr.f32.gmra.mrb[0].mxu0 %v1054
        %v1056 = vpop.f32.mrb[0].mxu0
        %v1057 = vadd.f32 %v896, %v1056
        %v1058 = vpop.f32.mrb[0].mxu0
        %1059 = vmatprep.mubr.f32.mxu0 0.0
        %v1060 = vand.u32 %v737, 4294901760
        %1061 = vmatmul.mubr.f32.gmra.mrb[0].mxu0 %v1060
        %v1062 = vpop.f32.mrb[0].mxu0
        %v1063 = vadd.f32 %v906, %v1062
        %v1064 = vpop.f32.mrb[0].mxu0
        %1065 = vmatprep.mubr.f32.mxu0 0.0
        %v1066 = vand.u32 %v740, 4294901760
        %1067 = vmatmul.mubr.f32.gmra.mrb[0].mxu0 %v1066
        %v1068 = vpop.f32.mrb[0].mxu0
        %v1069 = vadd.f32 %v916, %v1068
        %v1070 = vpop.f32.mrb[0].mxu0
        %1071 = vdwg.mxu0
        %1072 = vmatprep.subr.mxu0 0.0
        %v1073 = vand.u32 %v743, 4294901760
        %v1074 = vsub.f32 %v743, %v1073
        %1075 = vmatpush1.xpose.msra.mxu0 %v1074
        %1076 = vmatprep.subr.mxu0 0.0
        %v1077 = vand.u32 %v746, 4294901760
        %v1078 = vsub.f32 %v746, %v1077
        %1079 = vmatpush1.xpose.msra.mxu0 %v1078
        %1080 = vmatprep.subr.mxu0 0.0
        %v1081 = vand.u32 %v749, 4294901760
        %v1082 = vsub.f32 %v749, %v1081
        %1083 = vmatpush1.xpose.msra.mxu0 %v1082
        %1084 = vmatprep.subr.mxu0 0.0
        %v1085 = vand.u32 %v752, 4294901760
        %v1086 = vsub.f32 %v752, %v1085
        %1087 = vmatpush1.xpose.msra.mxu0 %v1086
        %1088 = vmatprep.subr.mxu0 0.0
        %v1089 = vand.u32 %v755, 4294901760
        %v1090 = vsub.f32 %v755, %v1089
        %1091 = vmatpush1.xpose.msra.mxu0 %v1090
        %1092 = vmatprep.subr.mxu0 0.0
        %v1093 = vand.u32 %v758, 4294901760
        %v1094 = vsub.f32 %v758, %v1093
        %1095 = vmatpush1.xpose.msra.mxu0 %v1094
        %1096 = vmatprep.subr.mxu0 0.0
        %v1097 = vand.u32 %v761, 4294901760
        %v1098 = vsub.f32 %v761, %v1097
        %1099 = vmatpush1.xpose.msra.mxu0 %v1098
        %1100 = vmatprep.subr.mxu0 0.0
        %v1101 = vand.u32 %v764, 4294901760
        %v1102 = vsub.f32 %v764, %v1101
        %1103 = vmatpush1.xpose.msra.mxu0 %v1102
        %1104 = vmatprep.subr.mxu0 0.0
        %1105 = vmatpush1.xpose.msra.mxu0 0.0
        %1106 = vmatprep.subr.mxu0 0.0
        %1107 = vmatpush1.xpose.msra.mxu0 0.0
        %1108 = vmatprep.subr.mxu0 0.0
        %1109 = vmatpush1.xpose.msra.mxu0 0.0
        %1110 = vmatprep.subr.mxu0 0.0
        %1111 = vmatpush1.xpose.msra.mxu0 0.0
        %1112 = vmatprep.subr.mxu0 0.0
        %1113 = vmatpush1.xpose.msra.mxu0 0.0
        %1114 = vmatprep.subr.mxu0 0.0
        %1115 = vmatpush1.xpose.msra.mxu0 0.0
        %1116 = vmatprep.subr.mxu0 0.0
        %1117 = vmatpush1.xpose.msra.mxu0 0.0
        %1118 = vmatprep.subr.mxu0 0.0
        %1119 = vmatpush1.xpose.msra.mxu0 0.0
        %1120 = vmatprep.subr.mxu0 0.0
        %1121 = vmatpush1.xpose.msra.mxu0 0.0
        %1122 = vmatprep.subr.mxu0 0.0
        %1123 = vmatpush1.xpose.msra.mxu0 0.0
        %1124 = vmatprep.subr.mxu0 0.0
        %1125 = vmatpush1.xpose.msra.mxu0 0.0
        %1126 = vmatprep.subr.mxu0 0.0
        %1127 = vmatpush1.xpose.msra.mxu0 0.0
        %1128 = vmatprep.subr.mxu0 0.0
        %1129 = vmatpush1.xpose.msra.mxu0 0.0
        %1130 = vmatprep.subr.mxu0 0.0
        %1131 = vmatpush1.xpose.msra.mxu0 0.0
        %1132 = vmatprep.subr.mxu0 0.0
        %1133 = vmatpush1.xpose.msra.mxu0 0.0
        %1134 = vmatprep.subr.mxu0 0.0
        %1135 = vmatpush1.xpose.msra.mxu0 0.0
        %1136 = vmatprep.subr.mxu0 0.0
        %1137 = vmatpush1.xpose.msra.mxu0 0.0
        %1138 = vmatprep.subr.mxu0 0.0
        %1139 = vmatpush1.xpose.msra.mxu0 0.0
        %1140 = vmatprep.subr.mxu0 0.0
        %1141 = vmatpush1.xpose.msra.mxu0 0.0
        %1142 = vmatprep.subr.mxu0 0.0
        %1143 = vmatpush1.xpose.msra.mxu0 0.0
        %1144 = vmatprep.subr.mxu0 0.0
        %1145 = vmatpush1.xpose.msra.mxu0 0.0
        %1146 = vmatprep.subr.mxu0 0.0
        %1147 = vmatpush1.xpose.msra.mxu0 0.0
        %1148 = vmatprep.subr.mxu0 0.0
        %1149 = vmatpush1.xpose.msra.mxu0 0.0
        %1150 = vmatprep.subr.mxu0 0.0
        %1151 = vmatpush1.xpose.msra.mxu0 0.0
        %1152 = vmatprep.mubr.f32.mxu0 0.0
        %v1153 = vand.u32 %v719, 4294901760
        %v1154 = vsub.f32 %v719, %v1153
        %1155 = vmatmul.mubr.f32.gmra.mrb[0].mxu0 %v1154
        %v1156 = vpop.f32.mrb[0].mxu0
        %v1157 = vadd.f32 %v1027, %v1156
        %v1158 = vpop.f32.mrb[0].mxu0
        %1159 = vmatprep.mubr.f32.mxu0 0.0
        %v1160 = vand.u32 %v722, 4294901760
        %v1161 = vsub.f32 %v722, %v1160
        %1162 = vmatmul.mubr.f32.gmra.mrb[0].mxu0 %v1161
        %v1163 = vpop.f32.mrb[0].mxu0
        %v1164 = vadd.f32 %v1033, %v1163
        %v1165 = vpop.f32.mrb[0].mxu0
        %1166 = vmatprep.mubr.f32.mxu0 0.0
        %v1167 = vand.u32 %v725, 4294901760
        %v1168 = vsub.f32 %v725, %v1167
        %1169 = vmatmul.mubr.f32.gmra.mrb[0].mxu0 %v1168
        %v1170 = vpop.f32.mrb[0].mxu0
        %v1171 = vadd.f32 %v1039, %v1170
        %v1172 = vpop.f32.mrb[0].mxu0
        %1173 = vmatprep.mubr.f32.mxu0 0.0
        %v1174 = vand.u32 %v728, 4294901760
        %v1175 = vsub.f32 %v728, %v1174
        %1176 = vmatmul.mubr.f32.gmra.mrb[0].mxu0 %v1175
        %v1177 = vpop.f32.mrb[0].mxu0
        %v1178 = vadd.f32 %v1045, %v1177
        %v1179 = vpop.f32.mrb[0].mxu0
        %1180 = vmatprep.mubr.f32.mxu0 0.0
        %v1181 = vand.u32 %v731, 4294901760
        %v1182 = vsub.f32 %v731, %v1181
        %1183 = vmatmul.mubr.f32.gmra.mrb[0].mxu0 %v1182
        %v1184 = vpop.f32.mrb[0].mxu0
        %v1185 = vadd.f32 %v1051, %v1184
        %v1186 = vpop.f32.mrb[0].mxu0
        %1187 = vmatprep.mubr.f32.mxu0 0.0
        %v1188 = vand.u32 %v734, 4294901760
        %v1189 = vsub.f32 %v734, %v1188
        %1190 = vmatmul.mubr.f32.gmra.mrb[0].mxu0 %v1189
        %v1191 = vpop.f32.mrb[0].mxu0
        %v1192 = vadd.f32 %v1057, %v1191
        %v1193 = vpop.f32.mrb[0].mxu0
        %1194 = vmatprep.mubr.f32.mxu0 0.0
        %v1195 = vand.u32 %v737, 4294901760
        %v1196 = vsub.f32 %v737, %v1195
        %1197 = vmatmul.mubr.f32.gmra.mrb[0].mxu0 %v1196
        %v1198 = vpop.f32.mrb[0].mxu0
        %v1199 = vadd.f32 %v1063, %v1198
        %v1200 = vpop.f32.mrb[0].mxu0
        %1201 = vmatprep.mubr.f32.mxu0 0.0
        %v1202 = vand.u32 %v740, 4294901760
        %v1203 = vsub.f32 %v740, %v1202
        %1204 = vmatmul.mubr.f32.gmra.mrb[0].mxu0 %v1203
        %v1205 = vpop.f32.mrb[0].mxu0
        %v1206 = vadd.f32 %v1069, %v1205
        %v1207 = vpop.f32.mrb[0].mxu0
        %1208 = vdwg.mxu0
        %1209 = vmatprep.subr.mxu0 0.0
        %v1210 = vand.u32 %v743, 4294901760
        %1211 = vmatpush1.xpose.msra.mxu0 %v1210
        %1212 = vmatprep.subr.mxu0 0.0
        %v1213 = vand.u32 %v746, 4294901760
        %1214 = vmatpush1.xpose.msra.mxu0 %v1213
        %1215 = vmatprep.subr.mxu0 0.0
        %v1216 = vand.u32 %v749, 4294901760
        %1217 = vmatpush1.xpose.msra.mxu0 %v1216
        %1218 = vmatprep.subr.mxu0 0.0
        %v1219 = vand.u32 %v752, 4294901760
        %1220 = vmatpush1.xpose.msra.mxu0 %v1219
        %1221 = vmatprep.subr.mxu0 0.0
        %v1222 = vand.u32 %v755, 4294901760
        %1223 = vmatpush1.xpose.msra.mxu0 %v1222
        %1224 = vmatprep.subr.mxu0 0.0
        %v1225 = vand.u32 %v758, 4294901760
        %1226 = vmatpush1.xpose.msra.mxu0 %v1225
        %1227 = vmatprep.subr.mxu0 0.0
        %v1228 = vand.u32 %v761, 4294901760
        %1229 = vmatpush1.xpose.msra.mxu0 %v1228
        %1230 = vmatprep.subr.mxu0 0.0
        %v1231 = vand.u32 %v764, 4294901760
        %1232 = vmatpush1.xpose.msra.mxu0 %v1231
        %1233 = vmatprep.subr.mxu0 0.0
        %1234 = vmatpush1.xpose.msra.mxu0 0.0
        %1235 = vmatprep.subr.mxu0 0.0
        %1236 = vmatpush1.xpose.msra.mxu0 0.0
        %1237 = vmatprep.subr.mxu0 0.0
        %1238 = vmatpush1.xpose.msra.mxu0 0.0
        %1239 = vmatprep.subr.mxu0 0.0
        %1240 = vmatpush1.xpose.msra.mxu0 0.0
        %1241 = vmatprep.subr.mxu0 0.0
        %1242 = vmatpush1.xpose.msra.mxu0 0.0
        %1243 = vmatprep.subr.mxu0 0.0
        %1244 = vmatpush1.xpose.msra.mxu0 0.0
        %1245 = vmatprep.subr.mxu0 0.0
        %1246 = vmatpush1.xpose.msra.mxu0 0.0
        %1247 = vmatprep.subr.mxu0 0.0
        %1248 = vmatpush1.xpose.msra.mxu0 0.0
        %1249 = vmatprep.subr.mxu0 0.0
        %1250 = vmatpush1.xpose.msra.mxu0 0.0
        %1251 = vmatprep.subr.mxu0 0.0
        %1252 = vmatpush1.xpose.msra.mxu0 0.0
        %1253 = vmatprep.subr.mxu0 0.0
        %1254 = vmatpush1.xpose.msra.mxu0 0.0
        %1255 = vmatprep.subr.mxu0 0.0
        %1256 = vmatpush1.xpose.msra.mxu0 0.0
        %1257 = vmatprep.subr.mxu0 0.0
        %1258 = vmatpush1.xpose.msra.mxu0 0.0
        %1259 = vmatprep.subr.mxu0 0.0
        %1260 = vmatpush1.xpose.msra.mxu0 0.0
        %1261 = vmatprep.subr.mxu0 0.0
        %1262 = vmatpush1.xpose.msra.mxu0 0.0
        %1263 = vmatprep.subr.mxu0 0.0
        %1264 = vmatpush1.xpose.msra.mxu0 0.0
        %1265 = vmatprep.subr.mxu0 0.0
        %1266 = vmatpush1.xpose.msra.mxu0 0.0
        %1267 = vmatprep.subr.mxu0 0.0
        %1268 = vmatpush1.xpose.msra.mxu0 0.0
        %1269 = vmatprep.subr.mxu0 0.0
        %1270 = vmatpush1.xpose.msra.mxu0 0.0
        %1271 = vmatprep.subr.mxu0 0.0
        %1272 = vmatpush1.xpose.msra.mxu0 0.0
        %1273 = vmatprep.subr.mxu0 0.0
        %1274 = vmatpush1.xpose.msra.mxu0 0.0
        %1275 = vmatprep.subr.mxu0 0.0
        %1276 = vmatpush1.xpose.msra.mxu0 0.0
        %1277 = vmatprep.subr.mxu0 0.0
        %1278 = vmatpush1.xpose.msra.mxu0 0.0
        %1279 = vmatprep.subr.mxu0 0.0
        %1280 = vmatpush1.xpose.msra.mxu0 0.0
        %1281 = vmatprep.mubr.f32.mxu0 0.0
        %v1282 = vand.u32 %v719, 4294901760
        %v1283 = vsub.f32 %v719, %v1282
        %v1284 = vand.u32 %v1283, 4294901760
        %1285 = vmatmul.mubr.f32.gmra.mrb[0].mxu0 %v1284
        %v1286 = vpop.f32.mrb[0].mxu0
        %v1287 = vadd.f32 %v1157, %v1286
        %v1288 = vpop.f32.mrb[0].mxu0
        %1289 = vmatprep.mubr.f32.mxu0 0.0
        %v1290 = vand.u32 %v722, 4294901760
        %v1291 = vsub.f32 %v722, %v1290
        %v1292 = vand.u32 %v1291, 4294901760
        %1293 = vmatmul.mubr.f32.gmra.mrb[0].mxu0 %v1292
        %v1294 = vpop.f32.mrb[0].mxu0
        %v1295 = vadd.f32 %v1164, %v1294
        %v1296 = vpop.f32.mrb[0].mxu0
        %1297 = vmatprep.mubr.f32.mxu0 0.0
        %v1298 = vand.u32 %v725, 4294901760
        %v1299 = vsub.f32 %v725, %v1298
        %v1300 = vand.u32 %v1299, 4294901760
        %1301 = vmatmul.mubr.f32.gmra.mrb[0].mxu0 %v1300
        %v1302 = vpop.f32.mrb[0].mxu0
        %v1303 = vadd.f32 %v1171, %v1302
        %v1304 = vpop.f32.mrb[0].mxu0
        %1305 = vmatprep.mubr.f32.mxu0 0.0
        %v1306 = vand.u32 %v728, 4294901760
        %v1307 = vsub.f32 %v728, %v1306
        %v1308 = vand.u32 %v1307, 4294901760
        %1309 = vmatmul.mubr.f32.gmra.mrb[0].mxu0 %v1308
        %v1310 = vpop.f32.mrb[0].mxu0
        %v1311 = vadd.f32 %v1178, %v1310
        %v1312 = vpop.f32.mrb[0].mxu0
        %1313 = vmatprep.mubr.f32.mxu0 0.0
        %v1314 = vand.u32 %v731, 4294901760
        %v1315 = vsub.f32 %v731, %v1314
        %v1316 = vand.u32 %v1315, 4294901760
        %1317 = vmatmul.mubr.f32.gmra.mrb[0].mxu0 %v1316
        %v1318 = vpop.f32.mrb[0].mxu0
        %v1319 = vadd.f32 %v1185, %v1318
        %v1320 = vpop.f32.mrb[0].mxu0
        %1321 = vmatprep.mubr.f32.mxu0 0.0
        %v1322 = vand.u32 %v734, 4294901760
        %v1323 = vsub.f32 %v734, %v1322
        %v1324 = vand.u32 %v1323, 4294901760
        %1325 = vmatmul.mubr.f32.gmra.mrb[0].mxu0 %v1324
        %v1326 = vpop.f32.mrb[0].mxu0
        %v1327 = vadd.f32 %v1192, %v1326
        %v1328 = vpop.f32.mrb[0].mxu0
        %1329 = vmatprep.mubr.f32.mxu0 0.0
        %v1330 = vand.u32 %v737, 4294901760
        %v1331 = vsub.f32 %v737, %v1330
        %v1332 = vand.u32 %v1331, 4294901760
        %1333 = vmatmul.mubr.f32.gmra.mrb[0].mxu0 %v1332
        %v1334 = vpop.f32.mrb[0].mxu0
        %v1335 = vadd.f32 %v1199, %v1334
        %v1336 = vpop.f32.mrb[0].mxu0
        %1337 = vmatprep.mubr.f32.mxu0 0.0
        %v1338 = vand.u32 %v740, 4294901760
        %v1339 = vsub.f32 %v740, %v1338
        %v1340 = vand.u32 %v1339, 4294901760
        %1341 = vmatmul.mubr.f32.gmra.mrb[0].mxu0 %v1340
        %v1342 = vpop.f32.mrb[0].mxu0
        %v1343 = vadd.f32 %v1206, %v1342
        %v1344 = vpop.f32.mrb[0].mxu0
        %1345 = vdwg.mxu0
        %1346 = vmatprep.subr.mxu0 0.0
        %v1347 = vand.u32 %v743, 4294901760
        %v1348 = vsub.f32 %v743, %v1347
        %v1349 = vand.u32 %v1348, 4294901760
        %1350 = vmatpush1.xpose.msra.mxu0 %v1349
        %1351 = vmatprep.subr.mxu0 0.0
        %v1352 = vand.u32 %v746, 4294901760
        %v1353 = vsub.f32 %v746, %v1352
        %v1354 = vand.u32 %v1353, 4294901760
        %1355 = vmatpush1.xpose.msra.mxu0 %v1354
        %1356 = vmatprep.subr.mxu0 0.0
        %v1357 = vand.u32 %v749, 4294901760
        %v1358 = vsub.f32 %v749, %v1357
        %v1359 = vand.u32 %v1358, 4294901760
        %1360 = vmatpush1.xpose.msra.mxu0 %v1359
        %1361 = vmatprep.subr.mxu0 0.0
        %v1362 = vand.u32 %v752, 4294901760
        %v1363 = vsub.f32 %v752, %v1362
        %v1364 = vand.u32 %v1363, 4294901760
        %1365 = vmatpush1.xpose.msra.mxu0 %v1364
        %1366 = vmatprep.subr.mxu0 0.0
        %v1367 = vand.u32 %v755, 4294901760
        %v1368 = vsub.f32 %v755, %v1367
        %v1369 = vand.u32 %v1368, 4294901760
        %1370 = vmatpush1.xpose.msra.mxu0 %v1369
        %1371 = vmatprep.subr.mxu0 0.0
        %v1372 = vand.u32 %v758, 4294901760
        %v1373 = vsub.f32 %v758, %v1372
        %v1374 = vand.u32 %v1373, 4294901760
        %1375 = vmatpush1.xpose.msra.mxu0 %v1374
        %1376 = vmatprep.subr.mxu0 0.0
        %v1377 = vand.u32 %v761, 4294901760
        %v1378 = vsub.f32 %v761, %v1377
        %v1379 = vand.u32 %v1378, 4294901760
        %1380 = vmatpush1.xpose.msra.mxu0 %v1379
        %1381 = vmatprep.subr.mxu0 0.0
        %v1382 = vand.u32 %v764, 4294901760
        %v1383 = vsub.f32 %v764, %v1382
        %v1384 = vand.u32 %v1383, 4294901760
        %1385 = vmatpush1.xpose.msra.mxu0 %v1384
        %1386 = vmatprep.subr.mxu0 0.0
        %1387 = vmatpush1.xpose.msra.mxu0 0.0
        %1388 = vmatprep.subr.mxu0 0.0
        %1389 = vmatpush1.xpose.msra.mxu0 0.0
        %1390 = vmatprep.subr.mxu0 0.0
        %1391 = vmatpush1.xpose.msra.mxu0 0.0
        %1392 = vmatprep.subr.mxu0 0.0
        %1393 = vmatpush1.xpose.msra.mxu0 0.0
        %1394 = vmatprep.subr.mxu0 0.0
        %1395 = vmatpush1.xpose.msra.mxu0 0.0
        %1396 = vmatprep.subr.mxu0 0.0
        %1397 = vmatpush1.xpose.msra.mxu0 0.0
        %1398 = vmatprep.subr.mxu0 0.0
        %1399 = vmatpush1.xpose.msra.mxu0 0.0
        %1400 = vmatprep.subr.mxu0 0.0
        %1401 = vmatpush1.xpose.msra.mxu0 0.0
        %1402 = vmatprep.subr.mxu0 0.0
        %1403 = vmatpush1.xpose.msra.mxu0 0.0
        %1404 = vmatprep.subr.mxu0 0.0
        %1405 = vmatpush1.xpose.msra.mxu0 0.0
        %1406 = vmatprep.subr.mxu0 0.0
        %1407 = vmatpush1.xpose.msra.mxu0 0.0
        %1408 = vmatprep.subr.mxu0 0.0
        %1409 = vmatpush1.xpose.msra.mxu0 0.0
        %1410 = vmatprep.subr.mxu0 0.0
        %1411 = vmatpush1.xpose.msra.mxu0 0.0
        %1412 = vmatprep.subr.mxu0 0.0
        %1413 = vmatpush1.xpose.msra.mxu0 0.0
        %1414 = vmatprep.subr.mxu0 0.0
        %1415 = vmatpush1.xpose.msra.mxu0 0.0
        %1416 = vmatprep.subr.mxu0 0.0
        %1417 = vmatpush1.xpose.msra.mxu0 0.0
        %1418 = vmatprep.subr.mxu0 0.0
        %1419 = vmatpush1.xpose.msra.mxu0 0.0
        %1420 = vmatprep.subr.mxu0 0.0
        %1421 = vmatpush1.xpose.msra.mxu0 0.0
        %1422 = vmatprep.subr.mxu0 0.0
        %1423 = vmatpush1.xpose.msra.mxu0 0.0
        %1424 = vmatprep.subr.mxu0 0.0
        %1425 = vmatpush1.xpose.msra.mxu0 0.0
        %1426 = vmatprep.subr.mxu0 0.0
        %1427 = vmatpush1.xpose.msra.mxu0 0.0
        %1428 = vmatprep.subr.mxu0 0.0
        %1429 = vmatpush1.xpose.msra.mxu0 0.0
        %1430 = vmatprep.subr.mxu0 0.0
        %1431 = vmatpush1.xpose.msra.mxu0 0.0
        %1432 = vmatprep.subr.mxu0 0.0
        %1433 = vmatpush1.xpose.msra.mxu0 0.0
        %1434 = vmatprep.mubr.f32.mxu0 0.0
        %v1435 = vand.u32 %v719, 4294901760
        %1436 = vmatmul.mubr.f32.gmra.mrb[0].mxu0 %v1435
        %v1437 = vpop.f32.mrb[0].mxu0
        %v1438 = vadd.f32 %v1287, %v1437
        %v1439 = vpop.f32.mrb[0].mxu0
        %1440 = vmatprep.mubr.f32.mxu0 0.0
        %v1441 = vand.u32 %v722, 4294901760
        %1442 = vmatmul.mubr.f32.gmra.mrb[0].mxu0 %v1441
        %v1443 = vpop.f32.mrb[0].mxu0
        %v1444 = vadd.f32 %v1295, %v1443
        %v1445 = vpop.f32.mrb[0].mxu0
        %1446 = vmatprep.mubr.f32.mxu0 0.0
        %v1447 = vand.u32 %v725, 4294901760
        %1448 = vmatmul.mubr.f32.gmra.mrb[0].mxu0 %v1447
        %v1449 = vpop.f32.mrb[0].mxu0
        %v1450 = vadd.f32 %v1303, %v1449
        %v1451 = vpop.f32.mrb[0].mxu0
        %1452 = vmatprep.mubr.f32.mxu0 0.0
        %v1453 = vand.u32 %v728, 4294901760
        %1454 = vmatmul.mubr.f32.gmra.mrb[0].mxu0 %v1453
        %v1455 = vpop.f32.mrb[0].mxu0
        %v1456 = vadd.f32 %v1311, %v1455
        %v1457 = vpop.f32.mrb[0].mxu0
        %1458 = vmatprep.mubr.f32.mxu0 0.0
        %v1459 = vand.u32 %v731, 4294901760
        %1460 = vmatmul.mubr.f32.gmra.mrb[0].mxu0 %v1459
        %v1461 = vpop.f32.mrb[0].mxu0
        %v1462 = vadd.f32 %v1319, %v1461
        %v1463 = vpop.f32.mrb[0].mxu0
        %1464 = vmatprep.mubr.f32.mxu0 0.0
        %v1465 = vand.u32 %v734, 4294901760
        %1466 = vmatmul.mubr.f32.gmra.mrb[0].mxu0 %v1465
        %v1467 = vpop.f32.mrb[0].mxu0
        %v1468 = vadd.f32 %v1327, %v1467
        %v1469 = vpop.f32.mrb[0].mxu0
        %1470 = vmatprep.mubr.f32.mxu0 0.0
        %v1471 = vand.u32 %v737, 4294901760
        %1472 = vmatmul.mubr.f32.gmra.mrb[0].mxu0 %v1471
        %v1473 = vpop.f32.mrb[0].mxu0
        %v1474 = vadd.f32 %v1335, %v1473
        %v1475 = vpop.f32.mrb[0].mxu0
        %1476 = vmatprep.mubr.f32.mxu0 0.0
        %v1477 = vand.u32 %v740, 4294901760
        %1478 = vmatmul.mubr.f32.gmra.mrb[0].mxu0 %v1477
        %v1479 = vpop.f32.mrb[0].mxu0
        %v1480 = vadd.f32 %v1343, %v1479
        %v1481 = vpop.f32.mrb[0].mxu0
        %1482 = vdwg.mxu0
        %1483 = vmatprep.subr.mxu0 0.0
        %v1484 = vand.u32 %v743, 4294901760
        %1485 = vmatpush1.xpose.msra.mxu0 %v1484
        %1486 = vmatprep.subr.mxu0 0.0
        %v1487 = vand.u32 %v746, 4294901760
        %1488 = vmatpush1.xpose.msra.mxu0 %v1487
        %1489 = vmatprep.subr.mxu0 0.0
        %v1490 = vand.u32 %v749, 4294901760
        %1491 = vmatpush1.xpose.msra.mxu0 %v1490
        %1492 = vmatprep.subr.mxu0 0.0
        %v1493 = vand.u32 %v752, 4294901760
        %1494 = vmatpush1.xpose.msra.mxu0 %v1493
        %1495 = vmatprep.subr.mxu0 0.0
        %v1496 = vand.u32 %v755, 4294901760
        %1497 = vmatpush1.xpose.msra.mxu0 %v1496
        %1498 = vmatprep.subr.mxu0 0.0
        %v1499 = vand.u32 %v758, 4294901760
        %1500 = vmatpush1.xpose.msra.mxu0 %v1499
        %1501 = vmatprep.subr.mxu0 0.0
        %v1502 = vand.u32 %v761, 4294901760
        %1503 = vmatpush1.xpose.msra.mxu0 %v1502
        %1504 = vmatprep.subr.mxu0 0.0
        %v1505 = vand.u32 %v764, 4294901760
        %1506 = vmatpush1.xpose.msra.mxu0 %v1505
        %1507 = vmatprep.subr.mxu0 0.0
        %1508 = vmatpush1.xpose.msra.mxu0 0.0
        %1509 = vmatprep.subr.mxu0 0.0
        %1510 = vmatpush1.xpose.msra.mxu0 0.0
        %1511 = vmatprep.subr.mxu0 0.0
        %1512 = vmatpush1.xpose.msra.mxu0 0.0
        %1513 = vmatprep.subr.mxu0 0.0
        %1514 = vmatpush1.xpose.msra.mxu0 0.0
        %1515 = vmatprep.subr.mxu0 0.0
        %1516 = vmatpush1.xpose.msra.mxu0 0.0
        %1517 = vmatprep.subr.mxu0 0.0
        %1518 = vmatpush1.xpose.msra.mxu0 0.0
        %1519 = vmatprep.subr.mxu0 0.0
        %1520 = vmatpush1.xpose.msra.mxu0 0.0
        %1521 = vmatprep.subr.mxu0 0.0
        %1522 = vmatpush1.xpose.msra.mxu0 0.0
        %1523 = vmatprep.subr.mxu0 0.0
        %1524 = vmatpush1.xpose.msra.mxu0 0.0
        %1525 = vmatprep.subr.mxu0 0.0
        %1526 = vmatpush1.xpose.msra.mxu0 0.0
        %1527 = vmatprep.subr.mxu0 0.0
        %1528 = vmatpush1.xpose.msra.mxu0 0.0
        %1529 = vmatprep.subr.mxu0 0.0
        %1530 = vmatpush1.xpose.msra.mxu0 0.0
        %1531 = vmatprep.subr.mxu0 0.0
        %1532 = vmatpush1.xpose.msra.mxu0 0.0
        %1533 = vmatprep.subr.mxu0 0.0
        %1534 = vmatpush1.xpose.msra.mxu0 0.0
        %1535 = vmatprep.subr.mxu0 0.0
        %1536 = vmatpush1.xpose.msra.mxu0 0.0
        %1537 = vmatprep.subr.mxu0 0.0
        %1538 = vmatpush1.xpose.msra.mxu0 0.0
        %1539 = vmatprep.subr.mxu0 0.0
        %1540 = vmatpush1.xpose.msra.mxu0 0.0
        %1541 = vmatprep.subr.mxu0 0.0
        %1542 = vmatpush1.xpose.msra.mxu0 0.0
        %1543 = vmatprep.subr.mxu0 0.0
        %1544 = vmatpush1.xpose.msra.mxu0 0.0
        %1545 = vmatprep.subr.mxu0 0.0
        %1546 = vmatpush1.xpose.msra.mxu0 0.0
        %1547 = vmatprep.subr.mxu0 0.0
        %1548 = vmatpush1.xpose.msra.mxu0 0.0
        %1549 = vmatprep.subr.mxu0 0.0
        %1550 = vmatpush1.xpose.msra.mxu0 0.0
        %1551 = vmatprep.subr.mxu0 0.0
        %1552 = vmatpush1.xpose.msra.mxu0 0.0
        %1553 = vmatprep.subr.mxu0 0.0
        %1554 = vmatpush1.xpose.msra.mxu0 0.0
        %1555 = vmatprep.mubr.f32.mxu0 0.0
        %v1556 = vand.u32 %v719, 4294901760
        %1557 = vmatmul.mubr.f32.gmra.mrb[0].mxu0 %v1556
        %v1558 = vpop.f32.mrb[0].mxu0
        %v1559 = vadd.f32 %v1438, %v1558
        %v1560 = vpop.f32.mrb[0].mxu0
        %1561 = vmatprep.mubr.f32.mxu0 0.0
        %v1562 = vand.u32 %v722, 4294901760
        %1563 = vmatmul.mubr.f32.gmra.mrb[0].mxu0 %v1562
        %v1564 = vpop.f32.mrb[0].mxu0
        %v1565 = vadd.f32 %v1444, %v1564
        %v1566 = vpop.f32.mrb[0].mxu0
        %1567 = vmatprep.mubr.f32.mxu0 0.0
        %v1568 = vand.u32 %v725, 4294901760
        %1569 = vmatmul.mubr.f32.gmra.mrb[0].mxu0 %v1568
        %v1570 = vpop.f32.mrb[0].mxu0
        %v1571 = vadd.f32 %v1450, %v1570
        %v1572 = vpop.f32.mrb[0].mxu0
        %1573 = vmatprep.mubr.f32.mxu0 0.0
        %v1574 = vand.u32 %v728, 4294901760
        %1575 = vmatmul.mubr.f32.gmra.mrb[0].mxu0 %v1574
        %v1576 = vpop.f32.mrb[0].mxu0
        %v1577 = vadd.f32 %v1456, %v1576
        %v1578 = vpop.f32.mrb[0].mxu0
        %1579 = vmatprep.mubr.f32.mxu0 0.0
        %v1580 = vand.u32 %v731, 4294901760
        %1581 = vmatmul.mubr.f32.gmra.mrb[0].mxu0 %v1580
        %v1582 = vpop.f32.mrb[0].mxu0
        %v1583 = vadd.f32 %v1462, %v1582
        %v1584 = vpop.f32.mrb[0].mxu0
        %1585 = vmatprep.mubr.f32.mxu0 0.0
        %v1586 = vand.u32 %v734, 4294901760
        %1587 = vmatmul.mubr.f32.gmra.mrb[0].mxu0 %v1586
        %v1588 = vpop.f32.mrb[0].mxu0
        %v1589 = vadd.f32 %v1468, %v1588
        %v1590 = vpop.f32.mrb[0].mxu0
        %1591 = vmatprep.mubr.f32.mxu0 0.0
        %v1592 = vand.u32 %v737, 4294901760
        %1593 = vmatmul.mubr.f32.gmra.mrb[0].mxu0 %v1592
        %v1594 = vpop.f32.mrb[0].mxu0
        %v1595 = vadd.f32 %v1474, %v1594
        %v1596 = vpop.f32.mrb[0].mxu0
        %1597 = vmatprep.mubr.f32.mxu0 0.0
        %v1598 = vand.u32 %v740, 4294901760
        %1599 = vmatmul.mubr.f32.gmra.mrb[0].mxu0 %v1598
        %v1600 = vpop.f32.mrb[0].mxu0
        %v1601 = vadd.f32 %v1480, %v1600
        %v1602 = vpop.f32.mrb[0].mxu0
        %1603 = vdwg.mxu0
        %v1604 = vlaneseq
        %v1605 = vshrl.u32 %v1604, 7
        %v1606 = vadd.s32 %v1605, 8
        %v1607 = vadd.s32 %v1605, 16
        %v1608 = vadd.s32 %v1605, 24
        %v1609 = vadd.s32 %v1605, 32
        %v1610 = vadd.s32 %v1605, 40
        %v1611 = vadd.s32 %v1605, 48
        %v1612 = vadd.s32 %v1605, 56
        %v1613 = vlaneseq
        %v1614 = vand.u32 %v1613, 127
        %v1615 = vshra.s32 %v1605, 4
        %v1616 = vshra.s32 %v1606, 4
        %v1617 = vshra.s32 %v1607, 4
        %v1618 = vshra.s32 %v1608, 4
        %v1619 = vshra.s32 %v1609, 4
        %v1620 = vshra.s32 %v1610, 4
        %v1621 = vshra.s32 %v1611, 4
        %v1622 = vshra.s32 %v1612, 4
        %v1623 = vshra.s32 %v1614, 4
        %vm1624 = vcmp.eq.s32.totalorder %v1615, %v1623
        %vm1625 = vcmp.eq.s32.totalorder %v1616, %v1623
        %vm1626 = vcmp.eq.s32.totalorder %v1617, %v1623
        %vm1627 = vcmp.eq.s32.totalorder %v1618, %v1623
        %vm1628 = vcmp.eq.s32.totalorder %v1619, %v1623
        %vm1629 = vcmp.eq.s32.totalorder %v1620, %v1623
        %vm1630 = vcmp.eq.s32.totalorder %v1621, %v1623
        %vm1631 = vcmp.eq.s32.totalorder %v1622, %v1623
        %v1632 = vsel %vm1624, %v1559, -1e+30
        %v1633 = vsel %vm1625, %v1565, -1e+30
        %v1634 = vsel %vm1626, %v1571, -1e+30
        %v1635 = vsel %vm1627, %v1577, -1e+30
        %v1636 = vsel %vm1628, %v1583, -1e+30
        %v1637 = vsel %vm1629, %v1589, -1e+30
        %v1638 = vsel %vm1630, %v1595, -1e+30
        %v1639 = vsel %vm1631, %v1601, -1e+30
        %vm1640 = vcmask 523264
        %v1641 = vsel %vm1640, %v1632, -inf
        %1642 = vmax.xlane.f32.xlu0 %v1641
        %v1643 = vpop.xlane.xlu0 %1642
        %v1644 = vsel %vm1640, %v1633, -inf
        %1645 = vmax.xlane.f32.xlu0 %v1644
        %v1646 = vpop.xlane.xlu0 %1645
        %v1647 = vsel %vm1640, %v1634, -inf
        %1648 = vmax.xlane.f32.xlu0 %v1647
        %v1649 = vpop.xlane.xlu0 %1648
        %v1650 = vsel %vm1640, %v1635, -inf
        %1651 = vmax.xlane.f32.xlu0 %v1650
        %v1652 = vpop.xlane.xlu0 %1651
        %v1653 = vsel %vm1640, %v1636, -inf
        %1654 = vmax.xlane.f32.xlu0 %v1653
        %v1655 = vpop.xlane.xlu0 %1654
        %v1656 = vsel %vm1640, %v1637, -inf
        %1657 = vmax.xlane.f32.xlu0 %v1656
        %v1658 = vpop.xlane.xlu0 %1657
        %v1659 = vsel %vm1640, %v1638, -inf
        %1660 = vmax.xlane.f32.xlu0 %v1659
        %v1661 = vpop.xlane.xlu0 %1660
        %v1662 = vsel %vm1640, %v1639, -inf
        %1663 = vmax.xlane.f32.xlu0 %v1662
        %v1664 = vpop.xlane.xlu0 %1663
        %v1665 = vsub.f32 %v1632, %v1643
        %v1666 = vsub.f32 %v1633, %v1646
        %v1667 = vsub.f32 %v1634, %v1649
        %v1668 = vsub.f32 %v1635, %v1652
        %v1669 = vsub.f32 %v1636, %v1655
        %v1670 = vsub.f32 %v1637, %v1658
        %v1671 = vsub.f32 %v1638, %v1661
        %v1672 = vsub.f32 %v1639, %v1664
        %v1673 = vmul.f32 %v1665, 1.442695
        %v1674 = vpow.pop %v1673
        %v1675 = vmul.f32 %v1666, 1.442695
        %v1676 = vpow.pop %v1675
        %v1677 = vmul.f32 %v1667, 1.442695
        %v1678 = vpow.pop %v1677
        %v1679 = vmul.f32 %v1668, 1.442695
        %v1680 = vpow.pop %v1679
        %v1681 = vmul.f32 %v1669, 1.442695
        %v1682 = vpow.pop %v1681
        %v1683 = vmul.f32 %v1670, 1.442695
        %v1684 = vpow.pop %v1683
        %v1685 = vmul.f32 %v1671, 1.442695
        %v1686 = vpow.pop %v1685
        %v1687 = vmul.f32 %v1672, 1.442695
        %v1688 = vpow.pop %v1687
        %v1689 = vsel %vm1640, %v1674, 0.0
        %1690 = vadd.xlane.f32.xlu0 %v1689
        %v1691 = vpop.xlane.xlu0 %1690
        %v1692 = vsel %vm1640, %v1676, 0.0
        %1693 = vadd.xlane.f32.xlu0 %v1692
        %v1694 = vpop.xlane.xlu0 %1693
        %v1695 = vsel %vm1640, %v1678, 0.0
        %1696 = vadd.xlane.f32.xlu0 %v1695
        %v1697 = vpop.xlane.xlu0 %1696
        %v1698 = vsel %vm1640, %v1680, 0.0
        %1699 = vadd.xlane.f32.xlu0 %v1698
        %v1700 = vpop.xlane.xlu0 %1699
        %v1701 = vsel %vm1640, %v1682, 0.0
        %1702 = vadd.xlane.f32.xlu0 %v1701
        %v1703 = vpop.xlane.xlu0 %1702
        %v1704 = vsel %vm1640, %v1684, 0.0
        %1705 = vadd.xlane.f32.xlu0 %v1704
        %v1706 = vpop.xlane.xlu0 %1705
        %v1707 = vsel %vm1640, %v1686, 0.0
        %1708 = vadd.xlane.f32.xlu0 %v1707
        %v1709 = vpop.xlane.xlu0 %1708
        %v1710 = vsel %vm1640, %v1688, 0.0
        %1711 = vadd.xlane.f32.xlu0 %v1710
        %v1712 = vpop.xlane.xlu0 %1711
        %v1713 = vrcp.pop %v1691
        %v1714 = vrcp.pop %v1694
        %v1715 = vrcp.pop %v1697
        %v1716 = vrcp.pop %v1700
        %v1717 = vrcp.pop %v1703
        %v1718 = vrcp.pop %v1706
        %v1719 = vrcp.pop %v1709
        %v1720 = vrcp.pop %v1712
        %v1721 = vmul.f32 %v1674, %v1713
        %v1722 = vmul.f32 %v1676, %v1714
        %v1723 = vmul.f32 %v1678, %v1715
        %v1724 = vmul.f32 %v1680, %v1716
        %v1725 = vmul.f32 %v1682, %v1717
        %v1726 = vmul.f32 %v1684, %v1718
        %v1727 = vmul.f32 %v1686, %v1719
        %v1728 = vmul.f32 %v1688, %v1720
        %1729 = vxpose.xlu0.b32.start [1/16] %v637, 128
        %1730 = vxpose.xlu0.b32.cont [2/16] %v638, 128
        %1731 = vxpose.xlu0.b32.cont [3/16] %v663, 128
        %1732 = vxpose.xlu0.b32.cont [4/16] %v664, 128
        %1733 = vxpose.xlu0.b32.cont [5/16] %v689, 128
        %1734 = vxpose.xlu0.b32.cont [6/16] %v690, 128
        %1735 = vxpose.xlu0.b32.cont [7/16] %v715, 128
        %1736 = vxpose.xlu0.b32.cont [8/16] %v716, 128
        %1737 = vxpose.xlu0.b32.cont [9/16] 0.0, 128
        %1738 = vxpose.xlu0.b32.cont [10/16] 0.0, 128
        %1739 = vxpose.xlu0.b32.cont [11/16] 0.0, 128
        %1740 = vxpose.xlu0.b32.cont [12/16] 0.0, 128
        %1741 = vxpose.xlu0.b32.cont [13/16] 0.0, 128
        %1742 = vxpose.xlu0.b32.cont [14/16] 0.0, 128
        %1743 = vxpose.xlu0.b32.cont [15/16] 0.0, 128
        %1744 = vxpose.xlu0.b32.end [16/16] 0.0, 128
        %v1745 = vpop.trf.xlu0
        %v1746 = vpop.trf.xlu0
        %v1747 = vpop.trf.xlu0
        %v1748 = vpop.trf.xlu0
        %v1749 = vpop.trf.xlu0
        %v1750 = vpop.trf.xlu0
        %v1751 = vpop.trf.xlu0
        %v1752 = vpop.trf.xlu0
        %v1753 = vpop.trf.xlu0
        %v1754 = vpop.trf.xlu0
        %v1755 = vpop.trf.xlu0
        %v1756 = vpop.trf.xlu0
        %v1757 = vpop.trf.xlu0
        %v1758 = vpop.trf.xlu0
        %v1759 = vpop.trf.xlu0
        %v1760 = vpop.trf.xlu0
        %v1762 = vsel %vm1640, %v1745, 0
        %v1765 = vsel %vm1640, %v1746, 0
        %v1768 = vsel %vm1640, %v1721, 0
        %v1771 = vsel %vm1640, %v1722, 0
        %v1774 = vsel %vm1640, %v1723, 0
        %v1777 = vsel %vm1640, %v1724, 0
        %v1780 = vsel %vm1640, %v1725, 0
        %v1783 = vsel %vm1640, %v1726, 0
        %v1786 = vsel %vm1640, %v1727, 0
        %v1789 = vsel %vm1640, %v1728, 0
        %1791 = vmatprep.subr.mxu0 0.0
        %v1792 = vand.u32 %v1768, 4294901760
        %1793 = vmatpush1.xpose.msra.mxu0 %v1792
        %1794 = vmatprep.subr.mxu0 0.0
        %v1795 = vand.u32 %v1771, 4294901760
        %1796 = vmatpush1.xpose.msra.mxu0 %v1795
        %1797 = vmatprep.subr.mxu0 0.0
        %v1798 = vand.u32 %v1774, 4294901760
        %1799 = vmatpush1.xpose.msra.mxu0 %v1798
        %1800 = vmatprep.subr.mxu0 0.0
        %v1801 = vand.u32 %v1777, 4294901760
        %1802 = vmatpush1.xpose.msra.mxu0 %v1801
        %1803 = vmatprep.subr.mxu0 0.0
        %v1804 = vand.u32 %v1780, 4294901760
        %1805 = vmatpush1.xpose.msra.mxu0 %v1804
        %1806 = vmatprep.subr.mxu0 0.0
        %v1807 = vand.u32 %v1783, 4294901760
        %1808 = vmatpush1.xpose.msra.mxu0 %v1807
        %1809 = vmatprep.subr.mxu0 0.0
        %v1810 = vand.u32 %v1786, 4294901760
        %1811 = vmatpush1.xpose.msra.mxu0 %v1810
        %1812 = vmatprep.subr.mxu0 0.0
        %v1813 = vand.u32 %v1789, 4294901760
        %1814 = vmatpush1.xpose.msra.mxu0 %v1813
        %1815 = vmatprep.subr.mxu0 0.0
        %1816 = vmatpush1.xpose.msra.mxu0 0.0
        %1817 = vmatprep.subr.mxu0 0.0
        %1818 = vmatpush1.xpose.msra.mxu0 0.0
        %1819 = vmatprep.subr.mxu0 0.0
        %1820 = vmatpush1.xpose.msra.mxu0 0.0
        %1821 = vmatprep.subr.mxu0 0.0
        %1822 = vmatpush1.xpose.msra.mxu0 0.0
        %1823 = vmatprep.subr.mxu0 0.0
        %1824 = vmatpush1.xpose.msra.mxu0 0.0
        %1825 = vmatprep.subr.mxu0 0.0
        %1826 = vmatpush1.xpose.msra.mxu0 0.0
        %1827 = vmatprep.subr.mxu0 0.0
        %1828 = vmatpush1.xpose.msra.mxu0 0.0
        %1829 = vmatprep.subr.mxu0 0.0
        %1830 = vmatpush1.xpose.msra.mxu0 0.0
        %1831 = vmatprep.subr.mxu0 0.0
        %1832 = vmatpush1.xpose.msra.mxu0 0.0
        %1833 = vmatprep.subr.mxu0 0.0
        %1834 = vmatpush1.xpose.msra.mxu0 0.0
        %1835 = vmatprep.subr.mxu0 0.0
        %1836 = vmatpush1.xpose.msra.mxu0 0.0
        %1837 = vmatprep.subr.mxu0 0.0
        %1838 = vmatpush1.xpose.msra.mxu0 0.0
        %1839 = vmatprep.subr.mxu0 0.0
        %1840 = vmatpush1.xpose.msra.mxu0 0.0
        %1841 = vmatprep.subr.mxu0 0.0
        %1842 = vmatpush1.xpose.msra.mxu0 0.0
        %1843 = vmatprep.subr.mxu0 0.0
        %1844 = vmatpush1.xpose.msra.mxu0 0.0
        %1845 = vmatprep.subr.mxu0 0.0
        %1846 = vmatpush1.xpose.msra.mxu0 0.0
        %1847 = vmatprep.subr.mxu0 0.0
        %1848 = vmatpush1.xpose.msra.mxu0 0.0
        %1849 = vmatprep.subr.mxu0 0.0
        %1850 = vmatpush1.xpose.msra.mxu0 0.0
        %1851 = vmatprep.subr.mxu0 0.0
        %1852 = vmatpush1.xpose.msra.mxu0 0.0
        %1853 = vmatprep.subr.mxu0 0.0
        %1854 = vmatpush1.xpose.msra.mxu0 0.0
        %1855 = vmatprep.subr.mxu0 0.0
        %1856 = vmatpush1.xpose.msra.mxu0 0.0
        %1857 = vmatprep.subr.mxu0 0.0
        %1858 = vmatpush1.xpose.msra.mxu0 0.0
        %1859 = vmatprep.subr.mxu0 0.0
        %1860 = vmatpush1.xpose.msra.mxu0 0.0
        %1861 = vmatprep.subr.mxu0 0.0
        %1862 = vmatpush1.xpose.msra.mxu0 0.0
        %1863 = vmatprep.mubr.f32.mxu0 0.0
        %v1864 = vand.u32 %v1762, 4294901760
        %v1865 = vsub.f32 %v1762, %v1864
        %v1866 = vand.u32 %v1865, 4294901760
        %v1867 = vsub.f32 %v1865, %v1866
        %v1868 = vand.u32 %v1867, 4294901760
        %1869 = vmatmul.mubr.f32.gmra.mrb[0].mxu0 %v1868
        %v1870 = vpop.f32.mrb[0].mxu0
        %v1871 = vadd.f32 0.0, %v1870
        %v1872 = vpop.f32.mrb[0].mxu0
        %1873 = vmatprep.mubr.f32.mxu0 0.0
        %v1874 = vand.u32 %v1765, 4294901760
        %v1875 = vsub.f32 %v1765, %v1874
        %v1876 = vand.u32 %v1875, 4294901760
        %v1877 = vsub.f32 %v1875, %v1876
        %v1878 = vand.u32 %v1877, 4294901760
        %1879 = vmatmul.mubr.f32.gmra.mrb[0].mxu0 %v1878
        %v1880 = vpop.f32.mrb[0].mxu0
        %v1881 = vadd.f32 0.0, %v1880
        %v1882 = vpop.f32.mrb[0].mxu0
        %1883 = vdwg.mxu0
        %1884 = vmatprep.subr.mxu0 0.0
        %v1885 = vand.u32 %v1768, 4294901760
        %v1886 = vsub.f32 %v1768, %v1885
        %v1887 = vand.u32 %v1886, 4294901760
        %v1888 = vsub.f32 %v1886, %v1887
        %v1889 = vand.u32 %v1888, 4294901760
        %1890 = vmatpush1.xpose.msra.mxu0 %v1889
        %1891 = vmatprep.subr.mxu0 0.0
        %v1892 = vand.u32 %v1771, 4294901760
        %v1893 = vsub.f32 %v1771, %v1892
        %v1894 = vand.u32 %v1893, 4294901760
        %v1895 = vsub.f32 %v1893, %v1894
        %v1896 = vand.u32 %v1895, 4294901760
        %1897 = vmatpush1.xpose.msra.mxu0 %v1896
        %1898 = vmatprep.subr.mxu0 0.0
        %v1899 = vand.u32 %v1774, 4294901760
        %v1900 = vsub.f32 %v1774, %v1899
        %v1901 = vand.u32 %v1900, 4294901760
        %v1902 = vsub.f32 %v1900, %v1901
        %v1903 = vand.u32 %v1902, 4294901760
        %1904 = vmatpush1.xpose.msra.mxu0 %v1903
        %1905 = vmatprep.subr.mxu0 0.0
        %v1906 = vand.u32 %v1777, 4294901760
        %v1907 = vsub.f32 %v1777, %v1906
        %v1908 = vand.u32 %v1907, 4294901760
        %v1909 = vsub.f32 %v1907, %v1908
        %v1910 = vand.u32 %v1909, 4294901760
        %1911 = vmatpush1.xpose.msra.mxu0 %v1910
        %1912 = vmatprep.subr.mxu0 0.0
        %v1913 = vand.u32 %v1780, 4294901760
        %v1914 = vsub.f32 %v1780, %v1913
        %v1915 = vand.u32 %v1914, 4294901760
        %v1916 = vsub.f32 %v1914, %v1915
        %v1917 = vand.u32 %v1916, 4294901760
        %1918 = vmatpush1.xpose.msra.mxu0 %v1917
        %1919 = vmatprep.subr.mxu0 0.0
        %v1920 = vand.u32 %v1783, 4294901760
        %v1921 = vsub.f32 %v1783, %v1920
        %v1922 = vand.u32 %v1921, 4294901760
        %v1923 = vsub.f32 %v1921, %v1922
        %v1924 = vand.u32 %v1923, 4294901760
        %1925 = vmatpush1.xpose.msra.mxu0 %v1924
        %1926 = vmatprep.subr.mxu0 0.0
        %v1927 = vand.u32 %v1786, 4294901760
        %v1928 = vsub.f32 %v1786, %v1927
        %v1929 = vand.u32 %v1928, 4294901760
        %v1930 = vsub.f32 %v1928, %v1929
        %v1931 = vand.u32 %v1930, 4294901760
        %1932 = vmatpush1.xpose.msra.mxu0 %v1931
        %1933 = vmatprep.subr.mxu0 0.0
        %v1934 = vand.u32 %v1789, 4294901760
        %v1935 = vsub.f32 %v1789, %v1934
        %v1936 = vand.u32 %v1935, 4294901760
        %v1937 = vsub.f32 %v1935, %v1936
        %v1938 = vand.u32 %v1937, 4294901760
        %1939 = vmatpush1.xpose.msra.mxu0 %v1938
        %1940 = vmatprep.subr.mxu0 0.0
        %1941 = vmatpush1.xpose.msra.mxu0 0.0
        %1942 = vmatprep.subr.mxu0 0.0
        %1943 = vmatpush1.xpose.msra.mxu0 0.0
        %1944 = vmatprep.subr.mxu0 0.0
        %1945 = vmatpush1.xpose.msra.mxu0 0.0
        %1946 = vmatprep.subr.mxu0 0.0
        %1947 = vmatpush1.xpose.msra.mxu0 0.0
        %1948 = vmatprep.subr.mxu0 0.0
        %1949 = vmatpush1.xpose.msra.mxu0 0.0
        %1950 = vmatprep.subr.mxu0 0.0
        %1951 = vmatpush1.xpose.msra.mxu0 0.0
        %1952 = vmatprep.subr.mxu0 0.0
        %1953 = vmatpush1.xpose.msra.mxu0 0.0
        %1954 = vmatprep.subr.mxu0 0.0
        %1955 = vmatpush1.xpose.msra.mxu0 0.0
        %1956 = vmatprep.subr.mxu0 0.0
        %1957 = vmatpush1.xpose.msra.mxu0 0.0
        %1958 = vmatprep.subr.mxu0 0.0
        %1959 = vmatpush1.xpose.msra.mxu0 0.0
        %1960 = vmatprep.subr.mxu0 0.0
        %1961 = vmatpush1.xpose.msra.mxu0 0.0
        %1962 = vmatprep.subr.mxu0 0.0
        %1963 = vmatpush1.xpose.msra.mxu0 0.0
        %1964 = vmatprep.subr.mxu0 0.0
        %1965 = vmatpush1.xpose.msra.mxu0 0.0
        %1966 = vmatprep.subr.mxu0 0.0
        %1967 = vmatpush1.xpose.msra.mxu0 0.0
        %1968 = vmatprep.subr.mxu0 0.0
        %1969 = vmatpush1.xpose.msra.mxu0 0.0
        %1970 = vmatprep.subr.mxu0 0.0
        %1971 = vmatpush1.xpose.msra.mxu0 0.0
        %1972 = vmatprep.subr.mxu0 0.0
        %1973 = vmatpush1.xpose.msra.mxu0 0.0
        %1974 = vmatprep.subr.mxu0 0.0
        %1975 = vmatpush1.xpose.msra.mxu0 0.0
        %1976 = vmatprep.subr.mxu0 0.0
        %1977 = vmatpush1.xpose.msra.mxu0 0.0
        %1978 = vmatprep.subr.mxu0 0.0
        %1979 = vmatpush1.xpose.msra.mxu0 0.0
        %1980 = vmatprep.subr.mxu0 0.0
        %1981 = vmatpush1.xpose.msra.mxu0 0.0
        %1982 = vmatprep.subr.mxu0 0.0
        %1983 = vmatpush1.xpose.msra.mxu0 0.0
        %1984 = vmatprep.subr.mxu0 0.0
        %1985 = vmatpush1.xpose.msra.mxu0 0.0
        %1986 = vmatprep.subr.mxu0 0.0
        %1987 = vmatpush1.xpose.msra.mxu0 0.0
        %1988 = vmatprep.mubr.f32.mxu0 0.0
        %v1989 = vand.u32 %v1762, 4294901760
        %1990 = vmatmul.mubr.f32.gmra.mrb[0].mxu0 %v1989
        %v1991 = vpop.f32.mrb[0].mxu0
        %v1992 = vadd.f32 %v1871, %v1991
        %v1993 = vpop.f32.mrb[0].mxu0
        %1994 = vmatprep.mubr.f32.mxu0 0.0
        %v1995 = vand.u32 %v1765, 4294901760
        %1996 = vmatmul.mubr.f32.gmra.mrb[0].mxu0 %v1995
        %v1997 = vpop.f32.mrb[0].mxu0
        %v1998 = vadd.f32 %v1881, %v1997
        %v1999 = vpop.f32.mrb[0].mxu0
        %2000 = vdwg.mxu0
        %2001 = vmatprep.subr.mxu0 0.0
        %v2002 = vand.u32 %v1768, 4294901760
        %v2003 = vsub.f32 %v1768, %v2002
        %2004 = vmatpush1.xpose.msra.mxu0 %v2003
        %2005 = vmatprep.subr.mxu0 0.0
        %v2006 = vand.u32 %v1771, 4294901760
        %v2007 = vsub.f32 %v1771, %v2006
        %2008 = vmatpush1.xpose.msra.mxu0 %v2007
        %2009 = vmatprep.subr.mxu0 0.0
        %v2010 = vand.u32 %v1774, 4294901760
        %v2011 = vsub.f32 %v1774, %v2010
        %2012 = vmatpush1.xpose.msra.mxu0 %v2011
        %2013 = vmatprep.subr.mxu0 0.0
        %v2014 = vand.u32 %v1777, 4294901760
        %v2015 = vsub.f32 %v1777, %v2014
        %2016 = vmatpush1.xpose.msra.mxu0 %v2015
        %2017 = vmatprep.subr.mxu0 0.0
        %v2018 = vand.u32 %v1780, 4294901760
        %v2019 = vsub.f32 %v1780, %v2018
        %2020 = vmatpush1.xpose.msra.mxu0 %v2019
        %2021 = vmatprep.subr.mxu0 0.0
        %v2022 = vand.u32 %v1783, 4294901760
        %v2023 = vsub.f32 %v1783, %v2022
        %2024 = vmatpush1.xpose.msra.mxu0 %v2023
        %2025 = vmatprep.subr.mxu0 0.0
        %v2026 = vand.u32 %v1786, 4294901760
        %v2027 = vsub.f32 %v1786, %v2026
        %2028 = vmatpush1.xpose.msra.mxu0 %v2027
        %2029 = vmatprep.subr.mxu0 0.0
        %v2030 = vand.u32 %v1789, 4294901760
        %v2031 = vsub.f32 %v1789, %v2030
        %2032 = vmatpush1.xpose.msra.mxu0 %v2031
        %2033 = vmatprep.subr.mxu0 0.0
        %2034 = vmatpush1.xpose.msra.mxu0 0.0
        %2035 = vmatprep.subr.mxu0 0.0
        %2036 = vmatpush1.xpose.msra.mxu0 0.0
        %2037 = vmatprep.subr.mxu0 0.0
        %2038 = vmatpush1.xpose.msra.mxu0 0.0
        %2039 = vmatprep.subr.mxu0 0.0
        %2040 = vmatpush1.xpose.msra.mxu0 0.0
        %2041 = vmatprep.subr.mxu0 0.0
        %2042 = vmatpush1.xpose.msra.mxu0 0.0
        %2043 = vmatprep.subr.mxu0 0.0
        %2044 = vmatpush1.xpose.msra.mxu0 0.0
        %2045 = vmatprep.subr.mxu0 0.0
        %2046 = vmatpush1.xpose.msra.mxu0 0.0
        %2047 = vmatprep.subr.mxu0 0.0
        %2048 = vmatpush1.xpose.msra.mxu0 0.0
        %2049 = vmatprep.subr.mxu0 0.0
        %2050 = vmatpush1.xpose.msra.mxu0 0.0
        %2051 = vmatprep.subr.mxu0 0.0
        %2052 = vmatpush1.xpose.msra.mxu0 0.0
        %2053 = vmatprep.subr.mxu0 0.0
        %2054 = vmatpush1.xpose.msra.mxu0 0.0
        %2055 = vmatprep.subr.mxu0 0.0
        %2056 = vmatpush1.xpose.msra.mxu0 0.0
        %2057 = vmatprep.subr.mxu0 0.0
        %2058 = vmatpush1.xpose.msra.mxu0 0.0
        %2059 = vmatprep.subr.mxu0 0.0
        %2060 = vmatpush1.xpose.msra.mxu0 0.0
        %2061 = vmatprep.subr.mxu0 0.0
        %2062 = vmatpush1.xpose.msra.mxu0 0.0
        %2063 = vmatprep.subr.mxu0 0.0
        %2064 = vmatpush1.xpose.msra.mxu0 0.0
        %2065 = vmatprep.subr.mxu0 0.0
        %2066 = vmatpush1.xpose.msra.mxu0 0.0
        %2067 = vmatprep.subr.mxu0 0.0
        %2068 = vmatpush1.xpose.msra.mxu0 0.0
        %2069 = vmatprep.subr.mxu0 0.0
        %2070 = vmatpush1.xpose.msra.mxu0 0.0
        %2071 = vmatprep.subr.mxu0 0.0
        %2072 = vmatpush1.xpose.msra.mxu0 0.0
        %2073 = vmatprep.subr.mxu0 0.0
        %2074 = vmatpush1.xpose.msra.mxu0 0.0
        %2075 = vmatprep.subr.mxu0 0.0
        %2076 = vmatpush1.xpose.msra.mxu0 0.0
        %2077 = vmatprep.subr.mxu0 0.0
        %2078 = vmatpush1.xpose.msra.mxu0 0.0
        %2079 = vmatprep.subr.mxu0 0.0
        %2080 = vmatpush1.xpose.msra.mxu0 0.0
        %2081 = vmatprep.mubr.f32.mxu0 0.0
        %v2082 = vand.u32 %v1762, 4294901760
        %v2083 = vsub.f32 %v1762, %v2082
        %2084 = vmatmul.mubr.f32.gmra.mrb[0].mxu0 %v2083
        %v2085 = vpop.f32.mrb[0].mxu0
        %v2086 = vadd.f32 %v1992, %v2085
        %v2087 = vpop.f32.mrb[0].mxu0
        %2088 = vmatprep.mubr.f32.mxu0 0.0
        %v2089 = vand.u32 %v1765, 4294901760
        %v2090 = vsub.f32 %v1765, %v2089
        %2091 = vmatmul.mubr.f32.gmra.mrb[0].mxu0 %v2090
        %v2092 = vpop.f32.mrb[0].mxu0
        %v2093 = vadd.f32 %v1998, %v2092
        %v2094 = vpop.f32.mrb[0].mxu0
        %2095 = vdwg.mxu0
        %2096 = vmatprep.subr.mxu0 0.0
        %v2097 = vand.u32 %v1768, 4294901760
        %2098 = vmatpush1.xpose.msra.mxu0 %v2097
        %2099 = vmatprep.subr.mxu0 0.0
        %v2100 = vand.u32 %v1771, 4294901760
        %2101 = vmatpush1.xpose.msra.mxu0 %v2100
        %2102 = vmatprep.subr.mxu0 0.0
        %v2103 = vand.u32 %v1774, 4294901760
        %2104 = vmatpush1.xpose.msra.mxu0 %v2103
        %2105 = vmatprep.subr.mxu0 0.0
        %v2106 = vand.u32 %v1777, 4294901760
        %2107 = vmatpush1.xpose.msra.mxu0 %v2106
        %2108 = vmatprep.subr.mxu0 0.0
        %v2109 = vand.u32 %v1780, 4294901760
        %2110 = vmatpush1.xpose.msra.mxu0 %v2109
        %2111 = vmatprep.subr.mxu0 0.0
        %v2112 = vand.u32 %v1783, 4294901760
        %2113 = vmatpush1.xpose.msra.mxu0 %v2112
        %2114 = vmatprep.subr.mxu0 0.0
        %v2115 = vand.u32 %v1786, 4294901760
        %2116 = vmatpush1.xpose.msra.mxu0 %v2115
        %2117 = vmatprep.subr.mxu0 0.0
        %v2118 = vand.u32 %v1789, 4294901760
        %2119 = vmatpush1.xpose.msra.mxu0 %v2118
        %2120 = vmatprep.subr.mxu0 0.0
        %2121 = vmatpush1.xpose.msra.mxu0 0.0
        %2122 = vmatprep.subr.mxu0 0.0
        %2123 = vmatpush1.xpose.msra.mxu0 0.0
        %2124 = vmatprep.subr.mxu0 0.0
        %2125 = vmatpush1.xpose.msra.mxu0 0.0
        %2126 = vmatprep.subr.mxu0 0.0
        %2127 = vmatpush1.xpose.msra.mxu0 0.0
        %2128 = vmatprep.subr.mxu0 0.0
        %2129 = vmatpush1.xpose.msra.mxu0 0.0
        %2130 = vmatprep.subr.mxu0 0.0
        %2131 = vmatpush1.xpose.msra.mxu0 0.0
        %2132 = vmatprep.subr.mxu0 0.0
        %2133 = vmatpush1.xpose.msra.mxu0 0.0
        %2134 = vmatprep.subr.mxu0 0.0
        %2135 = vmatpush1.xpose.msra.mxu0 0.0
        %2136 = vmatprep.subr.mxu0 0.0
        %2137 = vmatpush1.xpose.msra.mxu0 0.0
        %2138 = vmatprep.subr.mxu0 0.0
        %2139 = vmatpush1.xpose.msra.mxu0 0.0
        %2140 = vmatprep.subr.mxu0 0.0
        %2141 = vmatpush1.xpose.msra.mxu0 0.0
        %2142 = vmatprep.subr.mxu0 0.0
        %2143 = vmatpush1.xpose.msra.mxu0 0.0
        %2144 = vmatprep.subr.mxu0 0.0
        %2145 = vmatpush1.xpose.msra.mxu0 0.0
        %2146 = vmatprep.subr.mxu0 0.0
        %2147 = vmatpush1.xpose.msra.mxu0 0.0
        %2148 = vmatprep.subr.mxu0 0.0
        %2149 = vmatpush1.xpose.msra.mxu0 0.0
        %2150 = vmatprep.subr.mxu0 0.0
        %2151 = vmatpush1.xpose.msra.mxu0 0.0
        %2152 = vmatprep.subr.mxu0 0.0
        %2153 = vmatpush1.xpose.msra.mxu0 0.0
        %2154 = vmatprep.subr.mxu0 0.0
        %2155 = vmatpush1.xpose.msra.mxu0 0.0
        %2156 = vmatprep.subr.mxu0 0.0
        %2157 = vmatpush1.xpose.msra.mxu0 0.0
        %2158 = vmatprep.subr.mxu0 0.0
        %2159 = vmatpush1.xpose.msra.mxu0 0.0
        %2160 = vmatprep.subr.mxu0 0.0
        %2161 = vmatpush1.xpose.msra.mxu0 0.0
        %2162 = vmatprep.subr.mxu0 0.0
        %2163 = vmatpush1.xpose.msra.mxu0 0.0
        %2164 = vmatprep.subr.mxu0 0.0
        %2165 = vmatpush1.xpose.msra.mxu0 0.0
        %2166 = vmatprep.subr.mxu0 0.0
        %2167 = vmatpush1.xpose.msra.mxu0 0.0
        %2168 = vmatprep.mubr.f32.mxu0 0.0
        %v2169 = vand.u32 %v1762, 4294901760
        %v2170 = vsub.f32 %v1762, %v2169
        %v2171 = vand.u32 %v2170, 4294901760
        %2172 = vmatmul.mubr.f32.gmra.mrb[0].mxu0 %v2171
        %v2173 = vpop.f32.mrb[0].mxu0
        %v2174 = vadd.f32 %v2086, %v2173
        %v2175 = vpop.f32.mrb[0].mxu0
        %2176 = vmatprep.mubr.f32.mxu0 0.0
        %v2177 = vand.u32 %v1765, 4294901760
        %v2178 = vsub.f32 %v1765, %v2177
        %v2179 = vand.u32 %v2178, 4294901760
        %2180 = vmatmul.mubr.f32.gmra.mrb[0].mxu0 %v2179
        %v2181 = vpop.f32.mrb[0].mxu0
        %v2182 = vadd.f32 %v2093, %v2181
        %v2183 = vpop.f32.mrb[0].mxu0
        %2184 = vdwg.mxu0
        %2185 = vmatprep.subr.mxu0 0.0
        %v2186 = vand.u32 %v1768, 4294901760
        %v2187 = vsub.f32 %v1768, %v2186
        %v2188 = vand.u32 %v2187, 4294901760
        %2189 = vmatpush1.xpose.msra.mxu0 %v2188
        %2190 = vmatprep.subr.mxu0 0.0
        %v2191 = vand.u32 %v1771, 4294901760
        %v2192 = vsub.f32 %v1771, %v2191
        %v2193 = vand.u32 %v2192, 4294901760
        %2194 = vmatpush1.xpose.msra.mxu0 %v2193
        %2195 = vmatprep.subr.mxu0 0.0
        %v2196 = vand.u32 %v1774, 4294901760
        %v2197 = vsub.f32 %v1774, %v2196
        %v2198 = vand.u32 %v2197, 4294901760
        %2199 = vmatpush1.xpose.msra.mxu0 %v2198
        %2200 = vmatprep.subr.mxu0 0.0
        %v2201 = vand.u32 %v1777, 4294901760
        %v2202 = vsub.f32 %v1777, %v2201
        %v2203 = vand.u32 %v2202, 4294901760
        %2204 = vmatpush1.xpose.msra.mxu0 %v2203
        %2205 = vmatprep.subr.mxu0 0.0
        %v2206 = vand.u32 %v1780, 4294901760
        %v2207 = vsub.f32 %v1780, %v2206
        %v2208 = vand.u32 %v2207, 4294901760
        %2209 = vmatpush1.xpose.msra.mxu0 %v2208
        %2210 = vmatprep.subr.mxu0 0.0
        %v2211 = vand.u32 %v1783, 4294901760
        %v2212 = vsub.f32 %v1783, %v2211
        %v2213 = vand.u32 %v2212, 4294901760
        %2214 = vmatpush1.xpose.msra.mxu0 %v2213
        %2215 = vmatprep.subr.mxu0 0.0
        %v2216 = vand.u32 %v1786, 4294901760
        %v2217 = vsub.f32 %v1786, %v2216
        %v2218 = vand.u32 %v2217, 4294901760
        %2219 = vmatpush1.xpose.msra.mxu0 %v2218
        %2220 = vmatprep.subr.mxu0 0.0
        %v2221 = vand.u32 %v1789, 4294901760
        %v2222 = vsub.f32 %v1789, %v2221
        %v2223 = vand.u32 %v2222, 4294901760
        %2224 = vmatpush1.xpose.msra.mxu0 %v2223
        %2225 = vmatprep.subr.mxu0 0.0
        %2226 = vmatpush1.xpose.msra.mxu0 0.0
        %2227 = vmatprep.subr.mxu0 0.0
        %2228 = vmatpush1.xpose.msra.mxu0 0.0
        %2229 = vmatprep.subr.mxu0 0.0
        %2230 = vmatpush1.xpose.msra.mxu0 0.0
        %2231 = vmatprep.subr.mxu0 0.0
        %2232 = vmatpush1.xpose.msra.mxu0 0.0
        %2233 = vmatprep.subr.mxu0 0.0
        %2234 = vmatpush1.xpose.msra.mxu0 0.0
        %2235 = vmatprep.subr.mxu0 0.0
        %2236 = vmatpush1.xpose.msra.mxu0 0.0
        %2237 = vmatprep.subr.mxu0 0.0
        %2238 = vmatpush1.xpose.msra.mxu0 0.0
        %2239 = vmatprep.subr.mxu0 0.0
        %2240 = vmatpush1.xpose.msra.mxu0 0.0
        %2241 = vmatprep.subr.mxu0 0.0
        %2242 = vmatpush1.xpose.msra.mxu0 0.0
        %2243 = vmatprep.subr.mxu0 0.0
        %2244 = vmatpush1.xpose.msra.mxu0 0.0
        %2245 = vmatprep.subr.mxu0 0.0
        %2246 = vmatpush1.xpose.msra.mxu0 0.0
        %2247 = vmatprep.subr.mxu0 0.0
        %2248 = vmatpush1.xpose.msra.mxu0 0.0
        %2249 = vmatprep.subr.mxu0 0.0
        %2250 = vmatpush1.xpose.msra.mxu0 0.0
        %2251 = vmatprep.subr.mxu0 0.0
        %2252 = vmatpush1.xpose.msra.mxu0 0.0
        %2253 = vmatprep.subr.mxu0 0.0
        %2254 = vmatpush1.xpose.msra.mxu0 0.0
        %2255 = vmatprep.subr.mxu0 0.0
        %2256 = vmatpush1.xpose.msra.mxu0 0.0
        %2257 = vmatprep.subr.mxu0 0.0
        %2258 = vmatpush1.xpose.msra.mxu0 0.0
        %2259 = vmatprep.subr.mxu0 0.0
        %2260 = vmatpush1.xpose.msra.mxu0 0.0
        %2261 = vmatprep.subr.mxu0 0.0
        %2262 = vmatpush1.xpose.msra.mxu0 0.0
        %2263 = vmatprep.subr.mxu0 0.0
        %2264 = vmatpush1.xpose.msra.mxu0 0.0
        %2265 = vmatprep.subr.mxu0 0.0
        %2266 = vmatpush1.xpose.msra.mxu0 0.0
        %2267 = vmatprep.subr.mxu0 0.0
        %2268 = vmatpush1.xpose.msra.mxu0 0.0
        %2269 = vmatprep.subr.mxu0 0.0
        %2270 = vmatpush1.xpose.msra.mxu0 0.0
        %2271 = vmatprep.subr.mxu0 0.0
        %2272 = vmatpush1.xpose.msra.mxu0 0.0
        %2273 = vmatprep.mubr.f32.mxu0 0.0
        %v2274 = vand.u32 %v1762, 4294901760
        %2275 = vmatmul.mubr.f32.gmra.mrb[0].mxu0 %v2274
        %v2276 = vpop.f32.mrb[0].mxu0
        %v2277 = vadd.f32 %v2174, %v2276
        %v2278 = vpop.f32.mrb[0].mxu0
        %2279 = vmatprep.mubr.f32.mxu0 0.0
        %v2280 = vand.u32 %v1765, 4294901760
        %2281 = vmatmul.mubr.f32.gmra.mrb[0].mxu0 %v2280
        %v2282 = vpop.f32.mrb[0].mxu0
        %v2283 = vadd.f32 %v2182, %v2282
        %v2284 = vpop.f32.mrb[0].mxu0
        %2285 = vdwg.mxu0
        %2286 = vmatprep.subr.mxu0 0.0
        %v2287 = vand.u32 %v1768, 4294901760
        %2288 = vmatpush1.xpose.msra.mxu0 %v2287
        %2289 = vmatprep.subr.mxu0 0.0
        %v2290 = vand.u32 %v1771, 4294901760
        %2291 = vmatpush1.xpose.msra.mxu0 %v2290
        %2292 = vmatprep.subr.mxu0 0.0
        %v2293 = vand.u32 %v1774, 4294901760
        %2294 = vmatpush1.xpose.msra.mxu0 %v2293
        %2295 = vmatprep.subr.mxu0 0.0
        %v2296 = vand.u32 %v1777, 4294901760
        %2297 = vmatpush1.xpose.msra.mxu0 %v2296
        %2298 = vmatprep.subr.mxu0 0.0
        %v2299 = vand.u32 %v1780, 4294901760
        %2300 = vmatpush1.xpose.msra.mxu0 %v2299
        %2301 = vmatprep.subr.mxu0 0.0
        %v2302 = vand.u32 %v1783, 4294901760
        %2303 = vmatpush1.xpose.msra.mxu0 %v2302
        %2304 = vmatprep.subr.mxu0 0.0
        %v2305 = vand.u32 %v1786, 4294901760
        %2306 = vmatpush1.xpose.msra.mxu0 %v2305
        %2307 = vmatprep.subr.mxu0 0.0
        %v2308 = vand.u32 %v1789, 4294901760
        %2309 = vmatpush1.xpose.msra.mxu0 %v2308
        %2310 = vmatprep.subr.mxu0 0.0
        %2311 = vmatpush1.xpose.msra.mxu0 0.0
        %2312 = vmatprep.subr.mxu0 0.0
        %2313 = vmatpush1.xpose.msra.mxu0 0.0
        %2314 = vmatprep.subr.mxu0 0.0
        %2315 = vmatpush1.xpose.msra.mxu0 0.0
        %2316 = vmatprep.subr.mxu0 0.0
        %2317 = vmatpush1.xpose.msra.mxu0 0.0
        %2318 = vmatprep.subr.mxu0 0.0
        %2319 = vmatpush1.xpose.msra.mxu0 0.0
        %2320 = vmatprep.subr.mxu0 0.0
        %2321 = vmatpush1.xpose.msra.mxu0 0.0
        %2322 = vmatprep.subr.mxu0 0.0
        %2323 = vmatpush1.xpose.msra.mxu0 0.0
        %2324 = vmatprep.subr.mxu0 0.0
        %2325 = vmatpush1.xpose.msra.mxu0 0.0
        %2326 = vmatprep.subr.mxu0 0.0
        %2327 = vmatpush1.xpose.msra.mxu0 0.0
        %2328 = vmatprep.subr.mxu0 0.0
        %2329 = vmatpush1.xpose.msra.mxu0 0.0
        %2330 = vmatprep.subr.mxu0 0.0
        %2331 = vmatpush1.xpose.msra.mxu0 0.0
        %2332 = vmatprep.subr.mxu0 0.0
        %2333 = vmatpush1.xpose.msra.mxu0 0.0
        %2334 = vmatprep.subr.mxu0 0.0
        %2335 = vmatpush1.xpose.msra.mxu0 0.0
        %2336 = vmatprep.subr.mxu0 0.0
        %2337 = vmatpush1.xpose.msra.mxu0 0.0
        %2338 = vmatprep.subr.mxu0 0.0
        %2339 = vmatpush1.xpose.msra.mxu0 0.0
        %2340 = vmatprep.subr.mxu0 0.0
        %2341 = vmatpush1.xpose.msra.mxu0 0.0
        %2342 = vmatprep.subr.mxu0 0.0
        %2343 = vmatpush1.xpose.msra.mxu0 0.0
        %2344 = vmatprep.subr.mxu0 0.0
        %2345 = vmatpush1.xpose.msra.mxu0 0.0
        %2346 = vmatprep.subr.mxu0 0.0
        %2347 = vmatpush1.xpose.msra.mxu0 0.0
        %2348 = vmatprep.subr.mxu0 0.0
        %2349 = vmatpush1.xpose.msra.mxu0 0.0
        %2350 = vmatprep.subr.mxu0 0.0
        %2351 = vmatpush1.xpose.msra.mxu0 0.0
        %2352 = vmatprep.subr.mxu0 0.0
        %2353 = vmatpush1.xpose.msra.mxu0 0.0
        %2354 = vmatprep.subr.mxu0 0.0
        %2355 = vmatpush1.xpose.msra.mxu0 0.0
        %2356 = vmatprep.subr.mxu0 0.0
        %2357 = vmatpush1.xpose.msra.mxu0 0.0
        %2358 = vmatprep.mubr.f32.mxu0 0.0
        %v2359 = vand.u32 %v1762, 4294901760
        %2360 = vmatmul.mubr.f32.gmra.mrb[0].mxu0 %v2359
        %v2361 = vpop.f32.mrb[0].mxu0
        %v2362 = vadd.f32 %v2277, %v2361
        %v2363 = vpop.f32.mrb[0].mxu0
        %2364 = vmatprep.mubr.f32.mxu0 0.0
        %v2365 = vand.u32 %v1765, 4294901760
        %2366 = vmatmul.mubr.f32.gmra.mrb[0].mxu0 %v2365
        %v2367 = vpop.f32.mrb[0].mxu0
        %v2368 = vadd.f32 %v2283, %v2367
        %v2369 = vpop.f32.mrb[0].mxu0
        %2370 = vdwg.mxu0
        %2371 = vst.msk [vmem:[%s373] sm:$0xff] %vm1640, %v2362
        %2372 = vst.msk [vmem:[%s373 + $0x8] sm:$0xff] %vm1640, %v2368
        %s2373 = sand.u32 %s188, 1
        %s2374 = scalar_lea.sflag [#allocation4], %s2373
        %s2375 = sand.u32 %s188, 1
        %s2376 = smul.addr %s2375, 16
        %s2377 = scalar_lea.vmem [#allocation15], %s2376
        // Predicated region
        $region77: #{tpu_custom_call.1} parent=47 // pred_check
          %p2378 = pneg %p198
        $region78: #{tpu_custom_call.1} parent=47 // pred_check_branch
          %2380 = sbr.rel (%p2378) target = $region80
        $region79: #{tpu_custom_call.1} parent=47 // pred_region
          %s2382 = ssub.s32 256, 256
          %2383 = vsyncadd %s2374, %s2382
          %s2384 = smul.addr %s28, 2
          %s2385 = smul.addr %s2384, 128
          %s2386 = scalar_lea.hbm %s7, %s2385
          %s2387 = sshll.u32 %s2377, 4
          %s2388 = int_to_ptr.vmem [resolvable:$true] %s2387
          %2393 = dma.vmem_to_hbm [thread:$0]  %s2388, 256, %s2386, %s2374, 128, 128, 8
        $region80: #{tpu_custom_call.1} parent=47 // pred_fallthru
          _
      $region48: #{tpu_custom_call.1} parent=5 // pred_fallthru
        _
      %p2394 = scmp.le.s32.totalorder 2, %s23
      // Predicated region
      $region81: #{tpu_custom_call.1} parent=5 // pred_check
        %p2395 = pneg %p2394
      $region82: #{tpu_custom_call.1} parent=5 // pred_check_branch
        %2397 = sbr.rel (%p2395) target = $region84
      $region83: #{tpu_custom_call.1} parent=5 // pred_region
        %s2398 = ssub.s32 %s23, 2
        // Predicated region
        $region85: #{tpu_custom_call.1} parent=83 // pred_check
          %p2399 = pneg %p204
        $region86: #{tpu_custom_call.1} parent=83 // pred_check_branch
          %2401 = sbr.rel (%p2399) target = $region88
        $region87: #{tpu_custom_call.1} parent=83 // pred_region
          %s2402 = sand.u32 %s189, 1
          %s2403 = scalar_lea.sflag [#allocation4], %s2402
          %s2404 = sand.u32 %s189, 1
          %s2405 = smul.addr %s2404, 16
          %s2406 = scalar_lea.vmem [#allocation15], %s2405
          %2407 = dma.done %s2403, 256
        $region88: #{tpu_custom_call.1} parent=83 // pred_fallthru
          _
      $region84: #{tpu_custom_call.1} parent=5 // pred_fallthru
        _
    $region6: #{tpu_custom_call.1} parent=1 // loop_footer
      %s27 = sadd.s32 1, %s23
    $region7: #{tpu_custom_call.1} parent=1 // loop_footer_branch
      %22 = sbr.rel target = $region3
    $region8: #{tpu_custom_call.1} parent=1 // loop_exit
      _
    %2408 = vsyncpa [#allocation3], 1
    %s2409 = scalar_lea.sflag [#allocation3], 1
    %2410 = vsyncpa %s2409, 1
    %2411 = vsyncpa [#allocation4], 1
    %s2412 = scalar_lea.sflag [#allocation4], 1
    %2413 = vsyncpa %s2412, 1
    %2414 = vsyncpa [#allocation5], 1
    %s2415 = scalar_lea.sflag [#allocation5], 1
    %2416 = vsyncpa %s2415, 1
    %2417 = vsyncpa [#allocation8], 1
    %2418 = vsyncpa [#allocation11], 1
    %2419 = vsyncpa [#allocation14], 1

</llo_original>
